<compile_context>
chip_gen: v6e
topology: v6e:2x2x1
jax: 0.10.0
libtpu: 0.0.40
codegen_flags: <defaults>
</compile_context>

<pallas_src>
import functools

import jax
import jax.numpy as jnp
from jax.experimental import pallas as pl
from jax.experimental.pallas import tpu as pltpu


# Scoped VMEM limit used for the scoring kernel (safe on v5e/v6e/v7x; raises
# v5e's 16 MiB scoped default, stays under v7x's 64 MiB physical per-TC VMEM).
_VMEM_LIMIT_BYTES = 32 * 1024 * 1024


# -----------------------------------------------------------------------------
# Kernel 1: GRU recurrence, emit only time_emb[ts]  ->  (1, 2*D)
# -----------------------------------------------------------------------------
def _gru_kernel(ts_ref, gi_ref, h0_ref, whh_ref, bhh_ref, wp_ref, bp_ref,
                out_ref, *, hidden, num_steps, per_step_gi):
    """ts_ref: SMEM (1,) int32.  gi_ref: (1,3H) hoisted constant (rnn_input==0)
    or (T,3H) precomputed x@W_ih^T + b_ih.  h0_ref: (1,H).  whh_ref: (H,3H)
    (pre-transposed), bhh_ref: (1,3H).  wp_ref: (H,2D) (pre-transposed
    post_rnn), bp_ref: (1,2D).  out_ref: (1,2D) = post_rnn(h_ts)."""
    H = hidden
    ts = ts_ref[0]
    whh = whh_ref[...]
    bhh = bhh_ref[...]
    gi_const = None if per_step_gi else gi_ref[...]          # hoisted constant

    def step(t, carry):
        h, h_ts = carry
        gi = gi_ref[pl.ds(t, 1), :] if per_step_gi else gi_const   # (1, 3H)
        gh = jnp.dot(h, whh, preferred_element_type=jnp.float32) + bhh
        r = jax.nn.sigmoid(gi[:, :H] + gh[:, :H])
        z = jax.nn.sigmoid(gi[:, H:2 * H] + gh[:, H:2 * H])
        n = jnp.tanh(gi[:, 2 * H:] + r * gh[:, 2 * H:])
        h_new = (1.0 - z) * n + z * h
        h_ts = jnp.where(t == ts, h_new, h_ts)               # capture ts row
        return h_new, h_ts

    # Short, statically-known recurrence: unroll so the scheduler can overlap
    # the (1,H)@(H,3H) matmul of step t with the gate math of step t-1.
    # TODO(synk): for very large T a VPU formulation of the h@whh product would
    # avoid serial MXU push/pop latency; not worth it at small T.
    h0 = h0_ref[...]
    _, h_ts = jax.lax.fori_loop(0, num_steps, step, (h0, h0),
                                unroll=True if num_steps <= 32 else 8)

    out_ref[...] = (jnp.dot(h_ts, wp_ref[...],
                            preferred_element_type=jnp.float32) + bp_ref[...])


def gru_time_embedding_at(params, ts):
    """Returns post_rnn(GRU(rnn_input, h0))[ts] as a (1, 2D) row."""
    T = params["num_timestamps"]
    H = params["rnn_size"]
    D = params["embedding_dim"]

    # Decided statically at init (the module's rnn_input is a non-trainable
    # zeros Parameter) -> no device->host sync, jit-safe.
    per_step_gi = not params["rnn_input_is_zero"]
    if per_step_gi:
        gi = params["rnn_input"][:, 0, :] @ params["w_ih"].T + params["b_ih"]
    else:
        gi = params["b_ih"].reshape(1, 3 * H)                # (1, 3H)

    kernel = functools.partial(_gru_kernel, hidden=H, num_steps=T,
                               per_step_gi=per_step_gi)
    vmem = pl.BlockSpec(memory_space=pltpu.MemorySpace.VMEM)
    smem = pl.BlockSpec(memory_space=pltpu.MemorySpace.SMEM)
    return pl.pallas_call(
        kernel,
        out_shape=jax.ShapeDtypeStruct((1, 2 * D), jnp.float32),
        in_specs=[smem, vmem, vmem, vmem, vmem, vmem, vmem],
        out_specs=vmem,
    )(jnp.asarray([ts], jnp.int32),
      gi,
      params["h0"][0],
      params["w_hh_t"],
      params["b_hh_row"],
      params["w_post_t"],
      params["b_post_row"])


# -----------------------------------------------------------------------------
# Kernel 2: fused TNTComplEx scoring for ALL edge types, edges on lanes
# -----------------------------------------------------------------------------
def _score_kernel(rel_idx_ref, head_ref, tail_ref, phase_ref, out_ref, *, D):
    """head_ref/tail_ref: (2D, tile_e) edges-on-lanes blocks.
    phase_ref: (2D, 1) block of the per-relation phase table, already selected
    via the BlockSpec index_map from the scalar-prefetched per-tile relation id.
    out_ref: (1, tile_e) lane-dense row."""
    del rel_idx_ref                                # only used by the index_maps
    p = phase_ref[:D, :]                           # (D, 1) Re(rel * time)
    q = phase_ref[D:, :]                           # (D, 1) Im(rel * time)

    hr = head_ref[:D, :]                           # (D, TE)
    hi = head_ref[D:, :]
    a = hr * p - hi * q                            # Re(head * rel * time)
    b = hr * q + hi * p                            # Im(head * rel * time)
    acc = a * tail_ref[:D, :] + b * tail_ref[D:, :]
    # Reduce over the embedding (sublane) axis -> lane-dense (1, tile_e) store.
    out_ref[...] = jnp.sum(acc, axis=0, keepdims=True)


def _derive_tile_e(D, total_edges):
    """Largest lane-dense tile s.t. double-buffered head+tail fit ~half VMEM."""
    bytes_per_col = 2 * 2 * (2 * D) * 4            # head+tail, 2 buffers, f32
    budget = _VMEM_LIMIT_BYTES // 2
    max_cols = (budget // bytes_per_col) // 128 * 128
    tile = int(min(8192, max(128, max_cols)))
    # Keep >= 2 grid steps so v7x megacore can shard across both TensorCores.
    while tile > 512 and pl.cdiv(max(total_edges, 1), tile) < 2:
        tile //= 2
    return max(128, (tile // 128) * 128)


def tnt_scores(params, edge_index_dict, time_cur, *, tile_e=None):
    """Fused scoring of every edge type in one pallas_call."""
    D = params["embedding_dim"]
    twoD = 2 * D
    assert twoD % 8 == 0, "2*embedding_dim must be sublane-aligned (mult of 8)"
    node_emb = params["node_emb"]
    edge_types = params["metadata"][1]
    num_rel = len(edge_types)

    total_edges = sum(int(edge_index_dict[et].shape[1]) for et in edge_types)
    if tile_e is None:
        tile_e = _derive_tile_e(D, total_edges)
    assert tile_e % 128 == 0, "tile_e must be lane-dense (multiple of 128)"

    # Per-relation phase = rel (complex-multiply) time, column layout so it
    # broadcasts over the lane (edge) axis inside the kernel.  Tiny glue.
    rel = params["rel_emb"]                        # (num_rel, 2D)
    rr, ri = rel[:, :D], rel[:, D:]
    wr, wi = time_cur[:D], time_cur[D:]
    p = rr * wr - ri * wi                          # (num_rel, D)
    q = ri * wr + rr * wi
    phase_col = jnp.concatenate([p, q], axis=-1).reshape(num_rel * twoD, 1)

    # Pad / concat the *tiny* int32 edge-index arrays (index-0 padding); padded
    # columns produce garbage scores that are sliced off with the true E below.
    idx_parts, tile_rel_parts, counts = [], [], []
    for edge_t in edge_types:
        eli = jnp.asarray(edge_index_dict[edge_t], jnp.int32)   # (2, E)
        E = int(eli.shape[1])
        e_pad = int(pl.cdiv(E, tile_e) * tile_e) if E > 0 else 0
        if e_pad > E:
            eli = jnp.pad(eli, ((0, 0), (0, e_pad - E)))
        if e_pad > 0:
            idx_parts.append(eli)
            tile_rel_parts.append(
                jnp.full((e_pad // tile_e,),
                         params["rel_to_index"][edge_t], jnp.int32))
        counts.append((E, e_pad))

    if not idx_parts:                              # all relations empty
        return {et: jnp.zeros((0,), jnp.float32) for et in edge_types}

    idx_all = jnp.concatenate(idx_parts, axis=1)   # (2, total_pad) int32
    tile_rel = jnp.concatenate(tile_rel_parts, axis=0)   # (num_tiles,)
    total_pad = int(idx_all.shape[1])
    num_tiles = total_pad // tile_e

    # ONE gather per side, edges-on-lanes layout (no per-relation slab passes).
    # TODO(synk): in-kernel DMA gather from HBM node_emb for large D.
    head_all = node_emb[idx_all[0]].T              # (2D, total_pad)
    tail_all = node_emb[idx_all[1]].T

    cost = pl.CostEstimate(
        flops=10 * D * total_pad,
        transcendentals=0,
        bytes_accessed=(2 * twoD * total_pad + total_pad + num_rel * twoD) * 4)

    out = pl.pallas_call(
        functools.partial(_score_kernel, D=D),
        out_shape=jax.ShapeDtypeStruct((1, total_pad), jnp.float32),
        grid_spec=pltpu.PrefetchScalarGridSpec(
            num_scalar_prefetch=1,
            grid=(num_tiles,),
            in_specs=[
                pl.BlockSpec((twoD, tile_e), lambda i, ridx: (0, i)),
                pl.BlockSpec((twoD, tile_e), lambda i, ridx: (0, i)),
                # Select the (2D,1) phase rows of this tile's relation directly
                # via the index_map -> only 2D rows resident, no table in VMEM.
                pl.BlockSpec((twoD, 1), lambda i, ridx: (ridx[i], 0)),
            ],
            out_specs=pl.BlockSpec((1, tile_e), lambda i, ridx: (0, i)),
        ),
        compiler_params=pltpu.CompilerParams(
            dimension_semantics=("parallel",),
            vmem_limit_bytes=_VMEM_LIMIT_BYTES),
        cost_estimate=cost,
    )(tile_rel, head_all, tail_all, phase_col)

    flat = out[0]                                  # (total_pad,)
    h_dict = {}
    off = 0
    for edge_t, (E, e_pad) in zip(edge_types, counts):
        h_dict[edge_t] = flat[off:off + E]
        off += e_pad
    return h_dict


# -----------------------------------------------------------------------------
# Model wrapper (parameter setup, gathers, dict bookkeeping)
# -----------------------------------------------------------------------------
def init_params(key, embedding_dim, num_nodes, metadata, num_timestamps, rnn_size):
    D, H, T = embedding_dim, rnn_size, num_timestamps
    ks = jax.random.split(key, 10)
    w_hh = 0.1 * jax.random.normal(ks[4], (3 * H, H), jnp.float32)
    w_post = 0.1 * jax.random.normal(ks[7], (2 * D, H), jnp.float32)
    b_hh = 0.1 * jax.random.normal(ks[6], (3 * H,), jnp.float32)
    b_post = 0.1 * jax.random.normal(ks[8], (2 * D,), jnp.float32)
    params = {
        "embedding_dim": D,
        "rnn_size": H,
        "num_timestamps": T,
        "metadata": metadata,
        "rel_to_index": {mp: i for i, mp in enumerate(metadata[1])},
        "node_emb": jax.random.normal(ks[0], (num_nodes, 2 * D), jnp.float32),
        "rel_emb": jax.random.normal(ks[1], (len(metadata[1]), 2 * D), jnp.float32),
        "h0": jax.random.normal(ks[2], (1, 1, H), jnp.float32),
        # Matches the module: zeros Parameter with requires_grad=False.
        "rnn_input": jnp.zeros((T, 1, H), jnp.float32),
        "rnn_input_is_zero": True,                 # decided statically at init
        "w_ih": 0.1 * jax.random.normal(ks[3], (3 * H, H), jnp.float32),
        "w_hh": w_hh,
        "w_hh_t": w_hh.T,                          # pre-transposed for kernel
        "b_ih": 0.1 * jax.random.normal(ks[5], (3 * H,), jnp.float32),
        "b_hh": b_hh,
        "b_hh_row": b_hh.reshape(1, 3 * H),
        "w_post": w_post,
        "w_post_t": w_post.T,                      # pre-transposed for kernel
        "b_post": b_post,
        "b_post_row": b_post.reshape(1, 2 * D),
    }
    return params


def forward_pallas(params, edge_index_dict, ts, *, tile_e=None):
    t_row = gru_time_embedding_at(params, ts)        # (1, 2D)  Pallas kernel
    return tnt_scores(params, edge_index_dict, t_row[0], tile_e=tile_e)


# -----------------------------------------------------------------------------
# Pure-JAX reference (mirrors the PyTorch forward literally) for verification
# -----------------------------------------------------------------------------
def forward_reference(params, edge_index_dict, ts):
    D = params["embedding_dim"]
    H = params["rnn_size"]
    x = params["rnn_input"][:, 0, :]
    h = params["h0"][0]
    outs = []
    for t in range(x.shape[0]):
        gi = x[t:t + 1] @ params["w_ih"].T + params["b_ih"]
        gh = h @ params["w_hh"].T + params["b_hh"]
        r = jax.nn.sigmoid(gi[:, :H] + gh[:, :H])
        z = jax.nn.sigmoid(gi[:, H:2 * H] + gh[:, H:2 * H])
        n = jnp.tanh(gi[:, 2 * H:] + r * gh[:, 2 * H:])
        h = (1.0 - z) * n + z * h
        outs.append(h)
    time_emb = jnp.concatenate(outs, axis=0) @ params["w_post"].T + params["b_post"]
    t_cur = time_emb[ts]
    tre, tim = t_cur[:D], t_cur[D:]
    h_dict = {}
    for edge_t in params["metadata"][1]:
        eli = edge_index_dict[edge_t]
        head = params["node_emb"][eli[0]]
        tail = params["node_emb"][eli[1]]
        hr, hi = head[:, :D], head[:, D:]
        tr2, ti2 = tail[:, :D], tail[:, D:]
        rel = params["rel_emb"][params["rel_to_index"][edge_t]]
        rr, ri = rel[:D], rel[D:]
        h_dict[edge_t] = jnp.sum(
            (hr * rr * tre - hi * ri * tre - hi * rr * tim - hr * ri * tim) * tr2
            + (hi * rr * tre + hr * ri * tre + hr * rr * tim - hi * ri * tim) * ti2,
            axis=-1)
    return h_dict


if __name__ == "__main__":
    embedding_dim = 32
    rnn_size = 32
    num_timestamps = 8
    num_nodes = 20
    num_edges = 16
    ts = 3
    metadata = (["node"],
                [("node", "r0", "node"), ("node", "r1", "node")])

    key = jax.random.PRNGKey(0)
    pkey, ekey = jax.random.split(key)
    params = init_params(pkey, embedding_dim, num_nodes, metadata,
                         num_timestamps, rnn_size)

    edge_index_dict = {}
    ekeys = jax.random.split(ekey, len(metadata[1]))
    for i, edge_t in enumerate(metadata[1]):
        edge_index_dict[edge_t] = jax.random.randint(
            ekeys[i], (2, num_edges), 0, num_nodes)

    out = forward_pallas(params, edge_index_dict, ts)
    out = jax.tree_util.tree_map(jax.block_until_ready, out)

    ref = forward_reference(params, edge_index_dict, ts)
    ok = True
    for edge_t in metadata[1]:
        a = out[edge_t]
        b = ref[edge_t]
        if a.shape != b.shape or not jnp.allclose(a, b, rtol=1e-4, atol=1e-4):
            ok = False
            print("MISMATCH", edge_t, jnp.max(jnp.abs(a - b)))
    if ok:
        print("KERNEL_OK")
</pallas_src>

<mosaic_0001>
module attributes {stable_mosaic.version = 11 : i64} {
  func.func @_gru_kernel(%arg0: memref<1xi32, #tpu.memory_space<smem>>, %arg1: memref<1x96xf32, #tpu.memory_space<vmem>>, %arg2: memref<1x32xf32, #tpu.memory_space<vmem>>, %arg3: memref<32x96xf32, #tpu.memory_space<vmem>>, %arg4: memref<1x96xf32, #tpu.memory_space<vmem>>, %arg5: memref<32x64xf32, #tpu.memory_space<vmem>>, %arg6: memref<1x64xf32, #tpu.memory_space<vmem>>, %arg7: memref<1x64xf32, #tpu.memory_space<vmem>>) attributes {dimension_semantics = [], scalar_prefetch = 0 : i64, scratch_operands = 0 : i64, tpu.core_type = #tpu.core_type<tc>} {
    %c0 = arith.constant 0 : index
    %0 = memref.load %arg0[%c0] : memref<1xi32, #tpu.memory_space<smem>>
    %c0_0 = arith.constant 0 : index
    %c0_1 = arith.constant 0 : index
    %1 = vector.load %arg3[%c0_0, %c0_1] : memref<32x96xf32, #tpu.memory_space<vmem>>, vector<32x96xf32>
    %c0_2 = arith.constant 0 : index
    %c0_3 = arith.constant 0 : index
    %2 = vector.load %arg4[%c0_2, %c0_3] : memref<1x96xf32, #tpu.memory_space<vmem>>, vector<1x96xf32>
    %c0_4 = arith.constant 0 : index
    %c0_5 = arith.constant 0 : index
    %3 = vector.load %arg1[%c0_4, %c0_5] : memref<1x96xf32, #tpu.memory_space<vmem>>, vector<1x96xf32>
    %c0_6 = arith.constant 0 : index
    %c0_7 = arith.constant 0 : index
    %4 = vector.load %arg2[%c0_6, %c0_7] : memref<1x32xf32, #tpu.memory_space<vmem>>, vector<1x32xf32>
    %c0_i32 = arith.constant 0 : i32
    %cst = arith.constant dense<0.000000e+00> : vector<1x96xf32>
    %5 = tpu.matmul %4, %1, %cst {dimension_numbers = #tpu.dot_dimension_numbers<[1], [0], [0], [1], [0, 0, 1, 1], [], []>} : vector<1x32xf32>, vector<32x96xf32>, vector<1x96xf32> -> vector<1x96xf32>
    %6 = arith.addf %5, %2 : vector<1x96xf32>
    %7 = vector.extract_strided_slice %3 {offsets = [0, 0], sizes = [1, 32], strides = [1, 1]} : vector<1x96xf32> to vector<1x32xf32>
    %8 = vector.extract_strided_slice %6 {offsets = [0, 0], sizes = [1, 32], strides = [1, 1]} : vector<1x96xf32> to vector<1x32xf32>
    %9 = arith.addf %7, %8 : vector<1x32xf32>
    %10 = arith.negf %9 : vector<1x32xf32>
    %11 = math.exp %10 : vector<1x32xf32>
    %cst_8 = arith.constant 1.000000e+00 : f32
    %12 = vector.broadcast %cst_8 : f32 to vector<1x32xf32>
    %13 = arith.addf %12, %11 : vector<1x32xf32>
    %14 = arith.divf %12, %13 : vector<1x32xf32>
    %15 = vector.extract_strided_slice %3 {offsets = [0, 32], sizes = [1, 32], strides = [1, 1]} : vector<1x96xf32> to vector<1x32xf32>
    %16 = vector.extract_strided_slice %6 {offsets = [0, 32], sizes = [1, 32], strides = [1, 1]} : vector<1x96xf32> to vector<1x32xf32>
    %17 = arith.addf %15, %16 : vector<1x32xf32>
    %18 = arith.negf %17 : vector<1x32xf32>
    %19 = math.exp %18 : vector<1x32xf32>
    %cst_9 = arith.constant 1.000000e+00 : f32
    %20 = vector.broadcast %cst_9 : f32 to vector<1x32xf32>
    %21 = arith.addf %20, %19 : vector<1x32xf32>
    %22 = arith.divf %20, %21 : vector<1x32xf32>
    %23 = vector.extract_strided_slice %3 {offsets = [0, 64], sizes = [1, 32], strides = [1, 1]} : vector<1x96xf32> to vector<1x32xf32>
    %24 = vector.extract_strided_slice %6 {offsets = [0, 64], sizes = [1, 32], strides = [1, 1]} : vector<1x96xf32> to vector<1x32xf32>
    %25 = arith.mulf %14, %24 : vector<1x32xf32>
    %26 = arith.addf %23, %25 : vector<1x32xf32>
    %27 = math.tanh %26 : vector<1x32xf32>
    %cst_10 = arith.constant 1.000000e+00 : f32
    %28 = vector.broadcast %cst_10 : f32 to vector<1x32xf32>
    %29 = arith.subf %28, %22 : vector<1x32xf32>
    %30 = arith.mulf %29, %27 : vector<1x32xf32>
    %31 = arith.mulf %22, %4 : vector<1x32xf32>
    %32 = arith.addf %30, %31 : vector<1x32xf32>
    %33 = arith.cmpi eq, %c0_i32, %0 : i32
    %34 = arith.select %33, %32, %4 : vector<1x32xf32>
    %c1_i32 = arith.constant 1 : i32
    %cst_11 = arith.constant dense<0.000000e+00> : vector<1x96xf32>
    %35 = tpu.matmul %32, %1, %cst_11 {dimension_numbers = #tpu.dot_dimension_numbers<[1], [0], [0], [1], [0, 0, 1, 1], [], []>} : vector<1x32xf32>, vector<32x96xf32>, vector<1x96xf32> -> vector<1x96xf32>
    %36 = arith.addf %35, %2 : vector<1x96xf32>
    %37 = vector.extract_strided_slice %3 {offsets = [0, 0], sizes = [1, 32], strides = [1, 1]} : vector<1x96xf32> to vector<1x32xf32>
    %38 = vector.extract_strided_slice %36 {offsets = [0, 0], sizes = [1, 32], strides = [1, 1]} : vector<1x96xf32> to vector<1x32xf32>
    %39 = arith.addf %37, %38 : vector<1x32xf32>
    %40 = arith.negf %39 : vector<1x32xf32>
    %41 = math.exp %40 : vector<1x32xf32>
    %cst_12 = arith.constant 1.000000e+00 : f32
    %42 = vector.broadcast %cst_12 : f32 to vector<1x32xf32>
    %43 = arith.addf %42, %41 : vector<1x32xf32>
    %44 = arith.divf %42, %43 : vector<1x32xf32>
    %45 = vector.extract_strided_slice %3 {offsets = [0, 32], sizes = [1, 32], strides = [1, 1]} : vector<1x96xf32> to vector<1x32xf32>
    %46 = vector.extract_strided_slice %36 {offsets = [0, 32], sizes = [1, 32], strides = [1, 1]} : vector<1x96xf32> to vector<1x32xf32>
    %47 = arith.addf %45, %46 : vector<1x32xf32>
    %48 = arith.negf %47 : vector<1x32xf32>
    %49 = math.exp %48 : vector<1x32xf32>
    %cst_13 = arith.constant 1.000000e+00 : f32
    %50 = vector.broadcast %cst_13 : f32 to vector<1x32xf32>
    %51 = arith.addf %50, %49 : vector<1x32xf32>
    %52 = arith.divf %50, %51 : vector<1x32xf32>
    %53 = vector.extract_strided_slice %3 {offsets = [0, 64], sizes = [1, 32], strides = [1, 1]} : vector<1x96xf32> to vector<1x32xf32>
    %54 = vector.extract_strided_slice %36 {offsets = [0, 64], sizes = [1, 32], strides = [1, 1]} : vector<1x96xf32> to vector<1x32xf32>
    %55 = arith.mulf %44, %54 : vector<1x32xf32>
    %56 = arith.addf %53, %55 : vector<1x32xf32>
    %57 = math.tanh %56 : vector<1x32xf32>
    %cst_14 = arith.constant 1.000000e+00 : f32
    %58 = vector.broadcast %cst_14 : f32 to vector<1x32xf32>
    %59 = arith.subf %58, %52 : vector<1x32xf32>
    %60 = arith.mulf %59, %57 : vector<1x32xf32>
    %61 = arith.mulf %52, %32 : vector<1x32xf32>
    %62 = arith.addf %60, %61 : vector<1x32xf32>
    %63 = arith.cmpi eq, %c1_i32, %0 : i32
    %64 = arith.select %63, %62, %34 : vector<1x32xf32>
    %c2_i32 = arith.constant 2 : i32
    %cst_15 = arith.constant dense<0.000000e+00> : vector<1x96xf32>
    %65 = tpu.matmul %62, %1, %cst_15 {dimension_numbers = #tpu.dot_dimension_numbers<[1], [0], [0], [1], [0, 0, 1, 1], [], []>} : vector<1x32xf32>, vector<32x96xf32>, vector<1x96xf32> -> vector<1x96xf32>
    %66 = arith.addf %65, %2 : vector<1x96xf32>
    %67 = vector.extract_strided_slice %3 {offsets = [0, 0], sizes = [1, 32], strides = [1, 1]} : vector<1x96xf32> to vector<1x32xf32>
    %68 = vector.extract_strided_slice %66 {offsets = [0, 0], sizes = [1, 32], strides = [1, 1]} : vector<1x96xf32> to vector<1x32xf32>
    %69 = arith.addf %67, %68 : vector<1x32xf32>
    %70 = arith.negf %69 : vector<1x32xf32>
    %71 = math.exp %70 : vector<1x32xf32>
    %cst_16 = arith.constant 1.000000e+00 : f32
    %72 = vector.broadcast %cst_16 : f32 to vector<1x32xf32>
    %73 = arith.addf %72, %71 : vector<1x32xf32>
    %74 = arith.divf %72, %73 : vector<1x32xf32>
    %75 = vector.extract_strided_slice %3 {offsets = [0, 32], sizes = [1, 32], strides = [1, 1]} : vector<1x96xf32> to vector<1x32xf32>
    %76 = vector.extract_strided_slice %66 {offsets = [0, 32], sizes = [1, 32], strides = [1, 1]} : vector<1x96xf32> to vector<1x32xf32>
    %77 = arith.addf %75, %76 : vector<1x32xf32>
    %78 = arith.negf %77 : vector<1x32xf32>
    %79 = math.exp %78 : vector<1x32xf32>
    %cst_17 = arith.constant 1.000000e+00 : f32
    %80 = vector.broadcast %cst_17 : f32 to vector<1x32xf32>
    %81 = arith.addf %80, %79 : vector<1x32xf32>
    %82 = arith.divf %80, %81 : vector<1x32xf32>
    %83 = vector.extract_strided_slice %3 {offsets = [0, 64], sizes = [1, 32], strides = [1, 1]} : vector<1x96xf32> to vector<1x32xf32>
    %84 = vector.extract_strided_slice %66 {offsets = [0, 64], sizes = [1, 32], strides = [1, 1]} : vector<1x96xf32> to vector<1x32xf32>
    %85 = arith.mulf %74, %84 : vector<1x32xf32>
    %86 = arith.addf %83, %85 : vector<1x32xf32>
    %87 = math.tanh %86 : vector<1x32xf32>
    %cst_18 = arith.constant 1.000000e+00 : f32
    %88 = vector.broadcast %cst_18 : f32 to vector<1x32xf32>
    %89 = arith.subf %88, %82 : vector<1x32xf32>
    %90 = arith.mulf %89, %87 : vector<1x32xf32>
    %91 = arith.mulf %82, %62 : vector<1x32xf32>
    %92 = arith.addf %90, %91 : vector<1x32xf32>
    %93 = arith.cmpi eq, %c2_i32, %0 : i32
    %94 = arith.select %93, %92, %64 : vector<1x32xf32>
    %c3_i32 = arith.constant 3 : i32
    %cst_19 = arith.constant dense<0.000000e+00> : vector<1x96xf32>
    %95 = tpu.matmul %92, %1, %cst_19 {dimension_numbers = #tpu.dot_dimension_numbers<[1], [0], [0], [1], [0, 0, 1, 1], [], []>} : vector<1x32xf32>, vector<32x96xf32>, vector<1x96xf32> -> vector<1x96xf32>
    %96 = arith.addf %95, %2 : vector<1x96xf32>
    %97 = vector.extract_strided_slice %3 {offsets = [0, 0], sizes = [1, 32], strides = [1, 1]} : vector<1x96xf32> to vector<1x32xf32>
    %98 = vector.extract_strided_slice %96 {offsets = [0, 0], sizes = [1, 32], strides = [1, 1]} : vector<1x96xf32> to vector<1x32xf32>
    %99 = arith.addf %97, %98 : vector<1x32xf32>
    %100 = arith.negf %99 : vector<1x32xf32>
    %101 = math.exp %100 : vector<1x32xf32>
    %cst_20 = arith.constant 1.000000e+00 : f32
    %102 = vector.broadcast %cst_20 : f32 to vector<1x32xf32>
    %103 = arith.addf %102, %101 : vector<1x32xf32>
    %104 = arith.divf %102, %103 : vector<1x32xf32>
    %105 = vector.extract_strided_slice %3 {offsets = [0, 32], sizes = [1, 32], strides = [1, 1]} : vector<1x96xf32> to vector<1x32xf32>
    %106 = vector.extract_strided_slice %96 {offsets = [0, 32], sizes = [1, 32], strides = [1, 1]} : vector<1x96xf32> to vector<1x32xf32>
    %107 = arith.addf %105, %106 : vector<1x32xf32>
    %108 = arith.negf %107 : vector<1x32xf32>
    %109 = math.exp %108 : vector<1x32xf32>
    %cst_21 = arith.constant 1.000000e+00 : f32
    %110 = vector.broadcast %cst_21 : f32 to vector<1x32xf32>
    %111 = arith.addf %110, %109 : vector<1x32xf32>
    %112 = arith.divf %110, %111 : vector<1x32xf32>
    %113 = vector.extract_strided_slice %3 {offsets = [0, 64], sizes = [1, 32], strides = [1, 1]} : vector<1x96xf32> to vector<1x32xf32>
    %114 = vector.extract_strided_slice %96 {offsets = [0, 64], sizes = [1, 32], strides = [1, 1]} : vector<1x96xf32> to vector<1x32xf32>
    %115 = arith.mulf %104, %114 : vector<1x32xf32>
    %116 = arith.addf %113, %115 : vector<1x32xf32>
    %117 = math.tanh %116 : vector<1x32xf32>
    %cst_22 = arith.constant 1.000000e+00 : f32
    %118 = vector.broadcast %cst_22 : f32 to vector<1x32xf32>
    %119 = arith.subf %118, %112 : vector<1x32xf32>
    %120 = arith.mulf %119, %117 : vector<1x32xf32>
    %121 = arith.mulf %112, %92 : vector<1x32xf32>
    %122 = arith.addf %120, %121 : vector<1x32xf32>
    %123 = arith.cmpi eq, %c3_i32, %0 : i32
    %124 = arith.select %123, %122, %94 : vector<1x32xf32>
    %c4_i32 = arith.constant 4 : i32
    %cst_23 = arith.constant dense<0.000000e+00> : vector<1x96xf32>
    %125 = tpu.matmul %122, %1, %cst_23 {dimension_numbers = #tpu.dot_dimension_numbers<[1], [0], [0], [1], [0, 0, 1, 1], [], []>} : vector<1x32xf32>, vector<32x96xf32>, vector<1x96xf32> -> vector<1x96xf32>
    %126 = arith.addf %125, %2 : vector<1x96xf32>
    %127 = vector.extract_strided_slice %3 {offsets = [0, 0], sizes = [1, 32], strides = [1, 1]} : vector<1x96xf32> to vector<1x32xf32>
    %128 = vector.extract_strided_slice %126 {offsets = [0, 0], sizes = [1, 32], strides = [1, 1]} : vector<1x96xf32> to vector<1x32xf32>
    %129 = arith.addf %127, %128 : vector<1x32xf32>
    %130 = arith.negf %129 : vector<1x32xf32>
    %131 = math.exp %130 : vector<1x32xf32>
    %cst_24 = arith.constant 1.000000e+00 : f32
    %132 = vector.broadcast %cst_24 : f32 to vector<1x32xf32>
    %133 = arith.addf %132, %131 : vector<1x32xf32>
    %134 = arith.divf %132, %133 : vector<1x32xf32>
    %135 = vector.extract_strided_slice %3 {offsets = [0, 32], sizes = [1, 32], strides = [1, 1]} : vector<1x96xf32> to vector<1x32xf32>
    %136 = vector.extract_strided_slice %126 {offsets = [0, 32], sizes = [1, 32], strides = [1, 1]} : vector<1x96xf32> to vector<1x32xf32>
    %137 = arith.addf %135, %136 : vector<1x32xf32>
    %138 = arith.negf %137 : vector<1x32xf32>
    %139 = math.exp %138 : vector<1x32xf32>
    %cst_25 = arith.constant 1.000000e+00 : f32
    %140 = vector.broadcast %cst_25 : f32 to vector<1x32xf32>
    %141 = arith.addf %140, %139 : vector<1x32xf32>
    %142 = arith.divf %140, %141 : vector<1x32xf32>
    %143 = vector.extract_strided_slice %3 {offsets = [0, 64], sizes = [1, 32], strides = [1, 1]} : vector<1x96xf32> to vector<1x32xf32>
    %144 = vector.extract_strided_slice %126 {offsets = [0, 64], sizes = [1, 32], strides = [1, 1]} : vector<1x96xf32> to vector<1x32xf32>
    %145 = arith.mulf %134, %144 : vector<1x32xf32>
    %146 = arith.addf %143, %145 : vector<1x32xf32>
    %147 = math.tanh %146 : vector<1x32xf32>
    %cst_26 = arith.constant 1.000000e+00 : f32
    %148 = vector.broadcast %cst_26 : f32 to vector<1x32xf32>
    %149 = arith.subf %148, %142 : vector<1x32xf32>
    %150 = arith.mulf %149, %147 : vector<1x32xf32>
    %151 = arith.mulf %142, %122 : vector<1x32xf32>
    %152 = arith.addf %150, %151 : vector<1x32xf32>
    %153 = arith.cmpi eq, %c4_i32, %0 : i32
    %154 = arith.select %153, %152, %124 : vector<1x32xf32>
    %c5_i32 = arith.constant 5 : i32
    %cst_27 = arith.constant dense<0.000000e+00> : vector<1x96xf32>
    %155 = tpu.matmul %152, %1, %cst_27 {dimension_numbers = #tpu.dot_dimension_numbers<[1], [0], [0], [1], [0, 0, 1, 1], [], []>} : vector<1x32xf32>, vector<32x96xf32>, vector<1x96xf32> -> vector<1x96xf32>
    %156 = arith.addf %155, %2 : vector<1x96xf32>
    %157 = vector.extract_strided_slice %3 {offsets = [0, 0], sizes = [1, 32], strides = [1, 1]} : vector<1x96xf32> to vector<1x32xf32>
    %158 = vector.extract_strided_slice %156 {offsets = [0, 0], sizes = [1, 32], strides = [1, 1]} : vector<1x96xf32> to vector<1x32xf32>
    %159 = arith.addf %157, %158 : vector<1x32xf32>
    %160 = arith.negf %159 : vector<1x32xf32>
    %161 = math.exp %160 : vector<1x32xf32>
    %cst_28 = arith.constant 1.000000e+00 : f32
    %162 = vector.broadcast %cst_28 : f32 to vector<1x32xf32>
    %163 = arith.addf %162, %161 : vector<1x32xf32>
    %164 = arith.divf %162, %163 : vector<1x32xf32>
    %165 = vector.extract_strided_slice %3 {offsets = [0, 32], sizes = [1, 32], strides = [1, 1]} : vector<1x96xf32> to vector<1x32xf32>
    %166 = vector.extract_strided_slice %156 {offsets = [0, 32], sizes = [1, 32], strides = [1, 1]} : vector<1x96xf32> to vector<1x32xf32>
    %167 = arith.addf %165, %166 : vector<1x32xf32>
    %168 = arith.negf %167 : vector<1x32xf32>
    %169 = math.exp %168 : vector<1x32xf32>
    %cst_29 = arith.constant 1.000000e+00 : f32
    %170 = vector.broadcast %cst_29 : f32 to vector<1x32xf32>
    %171 = arith.addf %170, %169 : vector<1x32xf32>
    %172 = arith.divf %170, %171 : vector<1x32xf32>
    %173 = vector.extract_strided_slice %3 {offsets = [0, 64], sizes = [1, 32], strides = [1, 1]} : vector<1x96xf32> to vector<1x32xf32>
    %174 = vector.extract_strided_slice %156 {offsets = [0, 64], sizes = [1, 32], strides = [1, 1]} : vector<1x96xf32> to vector<1x32xf32>
    %175 = arith.mulf %164, %174 : vector<1x32xf32>
    %176 = arith.addf %173, %175 : vector<1x32xf32>
    %177 = math.tanh %176 : vector<1x32xf32>
    %cst_30 = arith.constant 1.000000e+00 : f32
    %178 = vector.broadcast %cst_30 : f32 to vector<1x32xf32>
    %179 = arith.subf %178, %172 : vector<1x32xf32>
    %180 = arith.mulf %179, %177 : vector<1x32xf32>
    %181 = arith.mulf %172, %152 : vector<1x32xf32>
    %182 = arith.addf %180, %181 : vector<1x32xf32>
    %183 = arith.cmpi eq, %c5_i32, %0 : i32
    %184 = arith.select %183, %182, %154 : vector<1x32xf32>
    %c6_i32 = arith.constant 6 : i32
    %cst_31 = arith.constant dense<0.000000e+00> : vector<1x96xf32>
    %185 = tpu.matmul %182, %1, %cst_31 {dimension_numbers = #tpu.dot_dimension_numbers<[1], [0], [0], [1], [0, 0, 1, 1], [], []>} : vector<1x32xf32>, vector<32x96xf32>, vector<1x96xf32> -> vector<1x96xf32>
    %186 = arith.addf %185, %2 : vector<1x96xf32>
    %187 = vector.extract_strided_slice %3 {offsets = [0, 0], sizes = [1, 32], strides = [1, 1]} : vector<1x96xf32> to vector<1x32xf32>
    %188 = vector.extract_strided_slice %186 {offsets = [0, 0], sizes = [1, 32], strides = [1, 1]} : vector<1x96xf32> to vector<1x32xf32>
    %189 = arith.addf %187, %188 : vector<1x32xf32>
    %190 = arith.negf %189 : vector<1x32xf32>
    %191 = math.exp %190 : vector<1x32xf32>
    %cst_32 = arith.constant 1.000000e+00 : f32
    %192 = vector.broadcast %cst_32 : f32 to vector<1x32xf32>
    %193 = arith.addf %192, %191 : vector<1x32xf32>
    %194 = arith.divf %192, %193 : vector<1x32xf32>
    %195 = vector.extract_strided_slice %3 {offsets = [0, 32], sizes = [1, 32], strides = [1, 1]} : vector<1x96xf32> to vector<1x32xf32>
    %196 = vector.extract_strided_slice %186 {offsets = [0, 32], sizes = [1, 32], strides = [1, 1]} : vector<1x96xf32> to vector<1x32xf32>
    %197 = arith.addf %195, %196 : vector<1x32xf32>
    %198 = arith.negf %197 : vector<1x32xf32>
    %199 = math.exp %198 : vector<1x32xf32>
    %cst_33 = arith.constant 1.000000e+00 : f32
    %200 = vector.broadcast %cst_33 : f32 to vector<1x32xf32>
    %201 = arith.addf %200, %199 : vector<1x32xf32>
    %202 = arith.divf %200, %201 : vector<1x32xf32>
    %203 = vector.extract_strided_slice %3 {offsets = [0, 64], sizes = [1, 32], strides = [1, 1]} : vector<1x96xf32> to vector<1x32xf32>
    %204 = vector.extract_strided_slice %186 {offsets = [0, 64], sizes = [1, 32], strides = [1, 1]} : vector<1x96xf32> to vector<1x32xf32>
    %205 = arith.mulf %194, %204 : vector<1x32xf32>
    %206 = arith.addf %203, %205 : vector<1x32xf32>
    %207 = math.tanh %206 : vector<1x32xf32>
    %cst_34 = arith.constant 1.000000e+00 : f32
    %208 = vector.broadcast %cst_34 : f32 to vector<1x32xf32>
    %209 = arith.subf %208, %202 : vector<1x32xf32>
    %210 = arith.mulf %209, %207 : vector<1x32xf32>
    %211 = arith.mulf %202, %182 : vector<1x32xf32>
    %212 = arith.addf %210, %211 : vector<1x32xf32>
    %213 = arith.cmpi eq, %c6_i32, %0 : i32
    %214 = arith.select %213, %212, %184 : vector<1x32xf32>
    %c7_i32 = arith.constant 7 : i32
    %cst_35 = arith.constant dense<0.000000e+00> : vector<1x96xf32>
    %215 = tpu.matmul %212, %1, %cst_35 {dimension_numbers = #tpu.dot_dimension_numbers<[1], [0], [0], [1], [0, 0, 1, 1], [], []>} : vector<1x32xf32>, vector<32x96xf32>, vector<1x96xf32> -> vector<1x96xf32>
    %216 = arith.addf %215, %2 : vector<1x96xf32>
    %217 = vector.extract_strided_slice %3 {offsets = [0, 0], sizes = [1, 32], strides = [1, 1]} : vector<1x96xf32> to vector<1x32xf32>
    %218 = vector.extract_strided_slice %216 {offsets = [0, 0], sizes = [1, 32], strides = [1, 1]} : vector<1x96xf32> to vector<1x32xf32>
    %219 = arith.addf %217, %218 : vector<1x32xf32>
    %220 = arith.negf %219 : vector<1x32xf32>
    %221 = math.exp %220 : vector<1x32xf32>
    %cst_36 = arith.constant 1.000000e+00 : f32
    %222 = vector.broadcast %cst_36 : f32 to vector<1x32xf32>
    %223 = arith.addf %222, %221 : vector<1x32xf32>
    %224 = arith.divf %222, %223 : vector<1x32xf32>
    %225 = vector.extract_strided_slice %3 {offsets = [0, 32], sizes = [1, 32], strides = [1, 1]} : vector<1x96xf32> to vector<1x32xf32>
    %226 = vector.extract_strided_slice %216 {offsets = [0, 32], sizes = [1, 32], strides = [1, 1]} : vector<1x96xf32> to vector<1x32xf32>
    %227 = arith.addf %225, %226 : vector<1x32xf32>
    %228 = arith.negf %227 : vector<1x32xf32>
    %229 = math.exp %228 : vector<1x32xf32>
    %cst_37 = arith.constant 1.000000e+00 : f32
    %230 = vector.broadcast %cst_37 : f32 to vector<1x32xf32>
    %231 = arith.addf %230, %229 : vector<1x32xf32>
    %232 = arith.divf %230, %231 : vector<1x32xf32>
    %233 = vector.extract_strided_slice %3 {offsets = [0, 64], sizes = [1, 32], strides = [1, 1]} : vector<1x96xf32> to vector<1x32xf32>
    %234 = vector.extract_strided_slice %216 {offsets = [0, 64], sizes = [1, 32], strides = [1, 1]} : vector<1x96xf32> to vector<1x32xf32>
    %235 = arith.mulf %224, %234 : vector<1x32xf32>
    %236 = arith.addf %233, %235 : vector<1x32xf32>
    %237 = math.tanh %236 : vector<1x32xf32>
    %cst_38 = arith.constant 1.000000e+00 : f32
    %238 = vector.broadcast %cst_38 : f32 to vector<1x32xf32>
    %239 = arith.subf %238, %232 : vector<1x32xf32>
    %240 = arith.mulf %239, %237 : vector<1x32xf32>
    %241 = arith.mulf %232, %212 : vector<1x32xf32>
    %242 = arith.addf %240, %241 : vector<1x32xf32>
    %243 = arith.cmpi eq, %c7_i32, %0 : i32
    %244 = arith.select %243, %242, %214 : vector<1x32xf32>
    %c8_i32 = arith.constant 8 : i32
    %c0_39 = arith.constant 0 : index
    %c0_40 = arith.constant 0 : index
    %245 = vector.load %arg5[%c0_39, %c0_40] : memref<32x64xf32, #tpu.memory_space<vmem>>, vector<32x64xf32>
    %cst_41 = arith.constant dense<0.000000e+00> : vector<1x64xf32>
    %246 = tpu.matmul %244, %245, %cst_41 {dimension_numbers = #tpu.dot_dimension_numbers<[1], [0], [0], [1], [0, 0, 1, 1], [], []>} : vector<1x32xf32>, vector<32x64xf32>, vector<1x64xf32> -> vector<1x64xf32>
    %c0_42 = arith.constant 0 : index
    %c0_43 = arith.constant 0 : index
    %247 = vector.load %arg6[%c0_42, %c0_43] : memref<1x64xf32, #tpu.memory_space<vmem>>, vector<1x64xf32>
    %248 = arith.addf %246, %247 : vector<1x64xf32>
    %c0_44 = arith.constant 0 : index
    %c0_45 = arith.constant 0 : index
    %249 = vector.load %arg7[%c0_44, %c0_45] : memref<1x64xf32, #tpu.memory_space<vmem>>, vector<1x64xf32>
    tpu.vector_store %arg7[%c0_44, %c0_45], %248 {strides = array<i32>} : memref<1x64xf32, #tpu.memory_space<vmem>>, vector<1x64xf32>,
    return
  }
}

</mosaic_0001>

<llo_original>
// kernel: tpu_custom_call.1
$region0: #{tpu_custom_call.1}
  #allocation0 [shape = 'u32[]', space=smem, size = 0x4, offset = 0x4, fixed_abs, tag = 'smem constant byte address 0x4 - core index']
  #allocation1 [shape = 'u32[144,128]{1,0:T(1,128)}', space=vmem, size = 0x12000, scoped, tag = 'internal scratch']
  #allocation2 [shape = 's32[1]{0:T(128)S(6)}', space=smem, size = 0x200, scoped, tag = 'scoped memory for tpu_custom_call.1']
  %s0 = inlined_call_operand.<no memory space> [shape: s32[1], index: 0, kind: input, shape index: {}]
  %s1 = inlined_call_operand.vmem [shape: f32[1,96], index: 1, kind: input, shape index: {}]
  %s2 = inlined_call_operand.vmem [shape: f32[1,32], index: 2, kind: input, shape index: {}]
  %s3 = inlined_call_operand.hbm [shape: f32[32,96], index: 3, kind: input, shape index: {}]
  %s4 = inlined_call_operand.vmem [shape: f32[1,96], index: 4, kind: input, shape index: {}]
  %s5 = inlined_call_operand.hbm [shape: f32[32,64], index: 5, kind: input, shape index: {}]
  %s6 = inlined_call_operand.vmem [shape: f32[1,64], index: 6, kind: input, shape index: {}]
  %s7 = inlined_call_operand.hbm [shape: f32[1,64], index: 7, kind: output, shape index: {}]
  %s8 = sld [smem:[#allocation0]]
  $region46: #{tpu_custom_call.1} parent=0
    _
  %s10 = ssub.s32 1, %s8
  %s11 = scalar_select 0, %s10, %s8
  %12 = sst [smem:[#allocation2]] %s0
  $region1: #{tpu_custom_call.1} parent=0
    #allocation3 [shape = 'u8[16384]{0}', space=vmem, size = 0x4000, scoped, tag = 'input window, operand 3, single buffered']
    #allocation4 [shape = 's32[1]{0}', space=sflag, size = 0x4, scoped, tag = 'scoped memory for tpu_custom_call.1']
    #allocation5 [shape = 's32[1]{0}', space=sflag, size = 0x4, scoped, tag = 'scoped memory for tpu_custom_call.1']
    #allocation6 [shape = 'u8[16384]{0}', space=vmem, size = 0x4000, scoped, tag = 'input window, operand 5, single buffered']
    #allocation7 [shape = 's32[1]{0}', space=sflag, size = 0x4, scoped, tag = 'scoped memory for tpu_custom_call.1']
    #allocation8 [shape = 'u8[512]{0}', space=vmem, size = 0x400, scoped, tag = 'output window, operand 0, single buffered']
    %13 = vsyncpa [#allocation4], 0
    %14 = vsyncpa [#allocation7], 0
    %15 = vsyncpa [#allocation5], 0
    // Predicated region
    $region2: #{tpu_custom_call.1} parent=1 // pred_check
      _
    $region3: #{tpu_custom_call.1} parent=1 // pred_check_branch
      %17 = sbr.rel (0) target = $region5
    $region4: #{tpu_custom_call.1} parent=1 // pred_region
      _
    $region5: #{tpu_custom_call.1} parent=1 // pred_fallthru
      _
    // Predicated region
    $region6: #{tpu_custom_call.1} parent=1 // pred_check
      _
    $region7: #{tpu_custom_call.1} parent=1 // pred_check_branch
      %19 = sbr.rel (0) target = $region9
    $region8: #{tpu_custom_call.1} parent=1 // pred_region
      _
    $region9: #{tpu_custom_call.1} parent=1 // pred_fallthru
      _
    // Predicated region
    $region10: #{tpu_custom_call.1} parent=1 // pred_check
      _
    $region11: #{tpu_custom_call.1} parent=1 // pred_check_branch
      %21 = sbr.rel (0) target = $region13
    $region12: #{tpu_custom_call.1} parent=1 // pred_region
      _
    $region13: #{tpu_custom_call.1} parent=1 // pred_fallthru
      _
    // Predicated region
    $region14: #{tpu_custom_call.1} parent=1 // pred_check
      _
    $region15: #{tpu_custom_call.1} parent=1 // pred_check_branch
      %23 = sbr.rel (0) target = $region17
    $region16: #{tpu_custom_call.1} parent=1 // pred_region
      %s25 = ssub.s32 512, 512
      %26 = vsyncadd [#allocation4], %s25
      %s27 = sshll.u32 [#allocation3], 4
      %s28 = int_to_ptr.vmem [resolvable:$true] %s27
      %33 = dma.hbm_to_vmem [thread:$0]  %s3, 512, %s28, [#allocation4], 128, 128, 8
    $region17: #{tpu_custom_call.1} parent=1 // pred_fallthru
      _
    // Predicated region
    $region18: #{tpu_custom_call.1} parent=1 // pred_check
      _
    $region19: #{tpu_custom_call.1} parent=1 // pred_check_branch
      %35 = sbr.rel (0) target = $region21
    $region20: #{tpu_custom_call.1} parent=1 // pred_region
      _
    $region21: #{tpu_custom_call.1} parent=1 // pred_fallthru
      _
    // Predicated region
    $region22: #{tpu_custom_call.1} parent=1 // pred_check
      _
    $region23: #{tpu_custom_call.1} parent=1 // pred_check_branch
      %37 = sbr.rel (0) target = $region25
    $region24: #{tpu_custom_call.1} parent=1 // pred_region
      %s39 = ssub.s32 512, 512
      %40 = vsyncadd [#allocation7], %s39
      %s41 = sshll.u32 [#allocation6], 4
      %s42 = int_to_ptr.vmem [resolvable:$true] %s41
      %47 = dma.hbm_to_vmem [thread:$0]  %s5, 512, %s42, [#allocation7], 128, 128, 8
    $region25: #{tpu_custom_call.1} parent=1 // pred_fallthru
      _
    // Predicated region
    $region26: #{tpu_custom_call.1} parent=1 // pred_check
      _
    $region27: #{tpu_custom_call.1} parent=1 // pred_check_branch
      %49 = sbr.rel (0) target = $region29
    $region28: #{tpu_custom_call.1} parent=1 // pred_region
      _
    $region29: #{tpu_custom_call.1} parent=1 // pred_fallthru
      _
    // Predicated region
    $region30: #{tpu_custom_call.1} parent=1 // pred_check
      _
    $region31: #{tpu_custom_call.1} parent=1 // pred_check_branch
      %51 = sbr.rel (0) target = $region33
    $region32: #{tpu_custom_call.1} parent=1 // pred_region
      %52 = dma.done [#allocation4], 512
    $region33: #{tpu_custom_call.1} parent=1 // pred_fallthru
      _
    // Predicated region
    $region34: #{tpu_custom_call.1} parent=1 // pred_check
      _
    $region35: #{tpu_custom_call.1} parent=1 // pred_check_branch
      %54 = sbr.rel (0) target = $region37
    $region36: #{tpu_custom_call.1} parent=1 // pred_region
      %55 = dma.done [#allocation7], 512
    $region37: #{tpu_custom_call.1} parent=1 // pred_fallthru
      _
    %s56 = sld [smem:[#allocation2]]
    %v57 = vld [vmem:[#allocation3] sm:$0xff]
    %v58 = vld [vmem:[#allocation3 + $0x8] sm:$0xff]
    %v59 = vld [vmem:[#allocation3 + $0x10] sm:$0xff]
    %v60 = vld [vmem:[#allocation3 + $0x18] sm:$0xff]
    %v61 = vld [vmem:[%s4] sm:$0x1]
    %v62 = vld [vmem:[%s1] sm:$0x1]
    %v63 = vld [vmem:[%s2] sm:$0x1]
    %vm64 = vcmask 261120
    %v66 = vsel %vm64, %v63, 0
    %68 = vmatprep.subr.mxu0 0.0
    %69 = vmatpush1.msra.mxu0 0.0
    %70 = vmatprep.subr.mxu0 0.0
    %71 = vmatpush1.msra.mxu0 0.0
    %72 = vmatprep.subr.mxu0 0.0
    %73 = vmatpush1.msra.mxu0 0.0
    %74 = vmatprep.subr.mxu0 0.0
    %75 = vmatpush1.msra.mxu0 0.0
    %76 = vmatprep.subr.mxu0 0.0
    %77 = vmatpush1.msra.mxu0 0.0
    %78 = vmatprep.subr.mxu0 0.0
    %79 = vmatpush1.msra.mxu0 0.0
    %80 = vmatprep.subr.mxu0 0.0
    %81 = vmatpush1.msra.mxu0 0.0
    %82 = vmatprep.subr.mxu0 0.0
    %83 = vmatpush1.msra.mxu0 0.0
    %84 = vmatprep.subr.mxu0 0.0
    %85 = vmatpush1.msra.mxu0 0.0
    %86 = vmatprep.subr.mxu0 0.0
    %87 = vmatpush1.msra.mxu0 0.0
    %88 = vmatprep.subr.mxu0 0.0
    %89 = vmatpush1.msra.mxu0 0.0
    %90 = vmatprep.subr.mxu0 0.0
    %91 = vmatpush1.msra.mxu0 0.0
    %92 = vmatprep.subr.mxu0 0.0
    %93 = vmatpush1.msra.mxu0 %v60
    %94 = vmatprep.subr.mxu0 0.0
    %95 = vmatpush1.msra.mxu0 %v59
    %96 = vmatprep.subr.mxu0 0.0
    %97 = vmatpush1.msra.mxu0 %v58
    %98 = vmatprep.subr.mxu0 0.0
    %99 = vmatpush1.msra.mxu0 %v57
    %100 = vmatprep.subr.mxu0 0.0
    %101 = vmatpush2.msra.mxu0 0.0
    %102 = vmatprep.subr.mxu0 0.0
    %103 = vmatpush2.msra.mxu0 0.0
    %104 = vmatprep.subr.mxu0 0.0
    %105 = vmatpush2.msra.mxu0 0.0
    %106 = vmatprep.subr.mxu0 0.0
    %107 = vmatpush2.msra.mxu0 0.0
    %108 = vmatprep.subr.mxu0 0.0
    %109 = vmatpush2.msra.mxu0 0.0
    %110 = vmatprep.subr.mxu0 0.0
    %111 = vmatpush2.msra.mxu0 0.0
    %112 = vmatprep.subr.mxu0 0.0
    %113 = vmatpush2.msra.mxu0 0.0
    %114 = vmatprep.subr.mxu0 0.0
    %115 = vmatpush2.msra.mxu0 0.0
    %116 = vmatprep.subr.mxu0 0.0
    %117 = vmatpush2.msra.mxu0 0.0
    %118 = vmatprep.subr.mxu0 0.0
    %119 = vmatpush2.msra.mxu0 0.0
    %120 = vmatprep.subr.mxu0 0.0
    %121 = vmatpush2.msra.mxu0 0.0
    %122 = vmatprep.subr.mxu0 0.0
    %123 = vmatpush2.msra.mxu0 0.0
    %124 = vmatprep.subr.mxu0 0.0
    %125 = vmatpush2.msra.mxu0 0.0
    %126 = vmatprep.subr.mxu0 0.0
    %127 = vmatpush2.msra.mxu0 0.0
    %128 = vmatprep.subr.mxu0 0.0
    %129 = vmatpush2.msra.mxu0 0.0
    %130 = vmatprep.subr.mxu0 0.0
    %131 = vmatpush2.msra.mxu0 0.0
    %132 = vmatprep.mubr.f32.mxu0 0.0
    %133 = vmatmul.mubr.f32.gmra.mxu0 %v66
    %v134 = vpop.f32.mrf.mxu0
    %v135 = vadd.f32 %v61, %v134
    %v136 = vpop.f32.mrf.mxu0
    %137 = vdwg.mxu0
    %v138 = vadd.f32 %v62, %v135
    %v139 = vxor.u32 %v138, 2147483648
    %v140 = vmul.f32 %v139, 1.442695
    %v141 = vpow.pop %v140
    %v142 = vadd.f32 %v141, 1.0
    %v143 = vrcp.pop %v142
    %v144 = vmul.f32 1.0, %v143
    %v147 = vunpack.c.l.s4 1966171168
    %v148 = vunpack.c.0.s8 %v147
    %v149 = vlaneseq
    %v150 = vshrl.u32 %v149, 7
    %v151 = vsub.s32 %v148, %v150
    %v152 = vrot.slane %v135, %v151
    %v154 = vunpack.c.l.s4 1966171168
    %v155 = vunpack.c.0.s8 %v154
    %v156 = vlaneseq
    %v157 = vshrl.u32 %v156, 7
    %v158 = vsub.s32 %v155, %v157
    %v159 = vrot.slane %v152, %v158
    %160 = vrot.lane.b32.xlu0 %v159, 64
    %v161 = vpop.permute.xlu0 %160
    %v163 = vmul.f32 %v144, %v161
    %165 = vrot.lane.b32.xlu0 %v163, 64
    %v166 = vpop.permute.xlu0 %165
    %v168 = vadd.f32 %v62, %v166
    %v169 = vtanh.pop %v168
    %v170 = vsub.f32 1.0, %v144
    %172 = vrot.lane.b32.xlu0 %v169, 96
    %v173 = vpop.permute.xlu0 %172
    %v175 = vmul.f32 %v170, %v173
    %176 = vrot.lane.b32.xlu0 %v63, 32
    %v177 = vpop.permute.xlu0 %176
    %v179 = vmul.f32 %v144, %v177
    %v180 = vadd.f32 %v175, %v179
    %p181 = scmp.eq.s32.totalorder %s56, 0
    %s182 = scalar_select %p181, 1, 0
    %v183 = vstv %s182
    %vm184 = vcmp.eq.s32.totalorder %v183, 1
    %v185 = vsel %vm184, %v180, %v177
    %v187 = vlaneseq
    %v188 = vshrl.u32 %v187, 7
    %v189 = vsub.s32 0, %v188
    %v190 = vrot.slane %v180, %v189
    %191 = vrot.lane.b32.xlu0 %v190, 96
    %v192 = vpop.permute.xlu0 %191
    %v193 = vsel %vm64, %v192, 0
    %195 = vmatprep.subr.mxu0 0.0
    %196 = vmatpush1.msra.mxu0 0.0
    %197 = vmatprep.subr.mxu0 0.0
    %198 = vmatpush1.msra.mxu0 0.0
    %199 = vmatprep.subr.mxu0 0.0
    %200 = vmatpush1.msra.mxu0 0.0
    %201 = vmatprep.subr.mxu0 0.0
    %202 = vmatpush1.msra.mxu0 0.0
    %203 = vmatprep.subr.mxu0 0.0
    %204 = vmatpush1.msra.mxu0 0.0
    %205 = vmatprep.subr.mxu0 0.0
    %206 = vmatpush1.msra.mxu0 0.0
    %207 = vmatprep.subr.mxu0 0.0
    %208 = vmatpush1.msra.mxu0 0.0
    %209 = vmatprep.subr.mxu0 0.0
    %210 = vmatpush1.msra.mxu0 0.0
    %211 = vmatprep.subr.mxu0 0.0
    %212 = vmatpush1.msra.mxu0 0.0
    %213 = vmatprep.subr.mxu0 0.0
    %214 = vmatpush1.msra.mxu0 0.0
    %215 = vmatprep.subr.mxu0 0.0
    %216 = vmatpush1.msra.mxu0 0.0
    %217 = vmatprep.subr.mxu0 0.0
    %218 = vmatpush1.msra.mxu0 0.0
    %219 = vmatprep.subr.mxu0 0.0
    %220 = vmatpush1.msra.mxu0 %v60
    %221 = vmatprep.subr.mxu0 0.0
    %222 = vmatpush1.msra.mxu0 %v59
    %223 = vmatprep.subr.mxu0 0.0
    %224 = vmatpush1.msra.mxu0 %v58
    %225 = vmatprep.subr.mxu0 0.0
    %226 = vmatpush1.msra.mxu0 %v57
    %227 = vmatprep.subr.mxu0 0.0
    %228 = vmatpush2.msra.mxu0 0.0
    %229 = vmatprep.subr.mxu0 0.0
    %230 = vmatpush2.msra.mxu0 0.0
    %231 = vmatprep.subr.mxu0 0.0
    %232 = vmatpush2.msra.mxu0 0.0
    %233 = vmatprep.subr.mxu0 0.0
    %234 = vmatpush2.msra.mxu0 0.0
    %235 = vmatprep.subr.mxu0 0.0
    %236 = vmatpush2.msra.mxu0 0.0
    %237 = vmatprep.subr.mxu0 0.0
    %238 = vmatpush2.msra.mxu0 0.0
    %239 = vmatprep.subr.mxu0 0.0
    %240 = vmatpush2.msra.mxu0 0.0
    %241 = vmatprep.subr.mxu0 0.0
    %242 = vmatpush2.msra.mxu0 0.0
    %243 = vmatprep.subr.mxu0 0.0
    %244 = vmatpush2.msra.mxu0 0.0
    %245 = vmatprep.subr.mxu0 0.0
    %246 = vmatpush2.msra.mxu0 0.0
    %247 = vmatprep.subr.mxu0 0.0
    %248 = vmatpush2.msra.mxu0 0.0
    %249 = vmatprep.subr.mxu0 0.0
    %250 = vmatpush2.msra.mxu0 0.0
    %251 = vmatprep.subr.mxu0 0.0
    %252 = vmatpush2.msra.mxu0 0.0
    %253 = vmatprep.subr.mxu0 0.0
    %254 = vmatpush2.msra.mxu0 0.0
    %255 = vmatprep.subr.mxu0 0.0
    %256 = vmatpush2.msra.mxu0 0.0
    %257 = vmatprep.subr.mxu0 0.0
    %258 = vmatpush2.msra.mxu0 0.0
    %259 = vmatprep.mubr.f32.mxu0 0.0
    %260 = vmatmul.mubr.f32.gmra.mxu0 %v193
    %v261 = vpop.f32.mrf.mxu0
    %v262 = vadd.f32 %v61, %v261
    %v263 = vpop.f32.mrf.mxu0
    %264 = vdwg.mxu0
    %v265 = vadd.f32 %v62, %v262
    %v266 = vxor.u32 %v265, 2147483648
    %v267 = vmul.f32 %v266, 1.442695
    %v268 = vpow.pop %v267
    %v269 = vadd.f32 %v268, 1.0
    %v270 = vrcp.pop %v269
    %v271 = vmul.f32 1.0, %v270
    %v274 = vunpack.c.l.s4 1966171168
    %v275 = vunpack.c.0.s8 %v274
    %v276 = vlaneseq
    %v277 = vshrl.u32 %v276, 7
    %v278 = vsub.s32 %v275, %v277
    %v279 = vrot.slane %v262, %v278
    %v281 = vunpack.c.l.s4 1966171168
    %v282 = vunpack.c.0.s8 %v281
    %v283 = vlaneseq
    %v284 = vshrl.u32 %v283, 7
    %v285 = vsub.s32 %v282, %v284
    %v286 = vrot.slane %v279, %v285
    %287 = vrot.lane.b32.xlu0 %v286, 64
    %v288 = vpop.permute.xlu0 %287
    %v290 = vmul.f32 %v271, %v288
    %292 = vrot.lane.b32.xlu0 %v290, 64
    %v293 = vpop.permute.xlu0 %292
    %v295 = vadd.f32 %v62, %v293
    %v296 = vtanh.pop %v295
    %v297 = vsub.f32 1.0, %v271
    %299 = vrot.lane.b32.xlu0 %v296, 96
    %v300 = vpop.permute.xlu0 %299
    %v302 = vmul.f32 %v297, %v300
    %v303 = vmul.f32 %v271, %v180
    %v304 = vadd.f32 %v302, %v303
    %p305 = scmp.eq.s32.totalorder %s56, 1
    %s306 = scalar_select %p305, 1, 0
    %v307 = vstv %s306
    %vm308 = vcmp.eq.s32.totalorder %v307, 1
    %v309 = vsel %vm308, %v304, %v185
    %v311 = vlaneseq
    %v312 = vshrl.u32 %v311, 7
    %v313 = vsub.s32 0, %v312
    %v314 = vrot.slane %v304, %v313
    %315 = vrot.lane.b32.xlu0 %v314, 96
    %v316 = vpop.permute.xlu0 %315
    %v317 = vsel %vm64, %v316, 0
    %319 = vmatprep.subr.mxu0 0.0
    %320 = vmatpush1.msra.mxu0 0.0
    %321 = vmatprep.subr.mxu0 0.0
    %322 = vmatpush1.msra.mxu0 0.0
    %323 = vmatprep.subr.mxu0 0.0
    %324 = vmatpush1.msra.mxu0 0.0
    %325 = vmatprep.subr.mxu0 0.0
    %326 = vmatpush1.msra.mxu0 0.0
    %327 = vmatprep.subr.mxu0 0.0
    %328 = vmatpush1.msra.mxu0 0.0
    %329 = vmatprep.subr.mxu0 0.0
    %330 = vmatpush1.msra.mxu0 0.0
    %331 = vmatprep.subr.mxu0 0.0
    %332 = vmatpush1.msra.mxu0 0.0
    %333 = vmatprep.subr.mxu0 0.0
    %334 = vmatpush1.msra.mxu0 0.0
    %335 = vmatprep.subr.mxu0 0.0
    %336 = vmatpush1.msra.mxu0 0.0
    %337 = vmatprep.subr.mxu0 0.0
    %338 = vmatpush1.msra.mxu0 0.0
    %339 = vmatprep.subr.mxu0 0.0
    %340 = vmatpush1.msra.mxu0 0.0
    %341 = vmatprep.subr.mxu0 0.0
    %342 = vmatpush1.msra.mxu0 0.0
    %343 = vmatprep.subr.mxu0 0.0
    %344 = vmatpush1.msra.mxu0 %v60
    %345 = vmatprep.subr.mxu0 0.0
    %346 = vmatpush1.msra.mxu0 %v59
    %347 = vmatprep.subr.mxu0 0.0
    %348 = vmatpush1.msra.mxu0 %v58
    %349 = vmatprep.subr.mxu0 0.0
    %350 = vmatpush1.msra.mxu0 %v57
    %351 = vmatprep.subr.mxu0 0.0
    %352 = vmatpush2.msra.mxu0 0.0
    %353 = vmatprep.subr.mxu0 0.0
    %354 = vmatpush2.msra.mxu0 0.0
    %355 = vmatprep.subr.mxu0 0.0
    %356 = vmatpush2.msra.mxu0 0.0
    %357 = vmatprep.subr.mxu0 0.0
    %358 = vmatpush2.msra.mxu0 0.0
    %359 = vmatprep.subr.mxu0 0.0
    %360 = vmatpush2.msra.mxu0 0.0
    %361 = vmatprep.subr.mxu0 0.0
    %362 = vmatpush2.msra.mxu0 0.0
    %363 = vmatprep.subr.mxu0 0.0
    %364 = vmatpush2.msra.mxu0 0.0
    %365 = vmatprep.subr.mxu0 0.0
    %366 = vmatpush2.msra.mxu0 0.0
    %367 = vmatprep.subr.mxu0 0.0
    %368 = vmatpush2.msra.mxu0 0.0
    %369 = vmatprep.subr.mxu0 0.0
    %370 = vmatpush2.msra.mxu0 0.0
    %371 = vmatprep.subr.mxu0 0.0
    %372 = vmatpush2.msra.mxu0 0.0
    %373 = vmatprep.subr.mxu0 0.0
    %374 = vmatpush2.msra.mxu0 0.0
    %375 = vmatprep.subr.mxu0 0.0
    %376 = vmatpush2.msra.mxu0 0.0
    %377 = vmatprep.subr.mxu0 0.0
    %378 = vmatpush2.msra.mxu0 0.0
    %379 = vmatprep.subr.mxu0 0.0
    %380 = vmatpush2.msra.mxu0 0.0
    %381 = vmatprep.subr.mxu0 0.0
    %382 = vmatpush2.msra.mxu0 0.0
    %383 = vmatprep.mubr.f32.mxu0 0.0
    %384 = vmatmul.mubr.f32.gmra.mxu0 %v317
    %v385 = vpop.f32.mrf.mxu0
    %v386 = vadd.f32 %v61, %v385
    %v387 = vpop.f32.mrf.mxu0
    %388 = vdwg.mxu0
    %v389 = vadd.f32 %v62, %v386
    %v390 = vxor.u32 %v389, 2147483648
    %v391 = vmul.f32 %v390, 1.442695
    %v392 = vpow.pop %v391
    %v393 = vadd.f32 %v392, 1.0
    %v394 = vrcp.pop %v393
    %v395 = vmul.f32 1.0, %v394
    %v398 = vunpack.c.l.s4 1966171168
    %v399 = vunpack.c.0.s8 %v398
    %v400 = vlaneseq
    %v401 = vshrl.u32 %v400, 7
    %v402 = vsub.s32 %v399, %v401
    %v403 = vrot.slane %v386, %v402
    %v405 = vunpack.c.l.s4 1966171168
    %v406 = vunpack.c.0.s8 %v405
    %v407 = vlaneseq
    %v408 = vshrl.u32 %v407, 7
    %v409 = vsub.s32 %v406, %v408
    %v410 = vrot.slane %v403, %v409
    %411 = vrot.lane.b32.xlu0 %v410, 64
    %v412 = vpop.permute.xlu0 %411
    %v414 = vmul.f32 %v395, %v412
    %416 = vrot.lane.b32.xlu0 %v414, 64
    %v417 = vpop.permute.xlu0 %416
    %v419 = vadd.f32 %v62, %v417
    %v420 = vtanh.pop %v419
    %v421 = vsub.f32 1.0, %v395
    %423 = vrot.lane.b32.xlu0 %v420, 96
    %v424 = vpop.permute.xlu0 %423
    %v426 = vmul.f32 %v421, %v424
    %v427 = vmul.f32 %v395, %v304
    %v428 = vadd.f32 %v426, %v427
    %p429 = scmp.eq.s32.totalorder %s56, 2
    %s430 = scalar_select %p429, 1, 0
    %v431 = vstv %s430
    %vm432 = vcmp.eq.s32.totalorder %v431, 1
    %v433 = vsel %vm432, %v428, %v309
    %v435 = vlaneseq
    %v436 = vshrl.u32 %v435, 7
    %v437 = vsub.s32 0, %v436
    %v438 = vrot.slane %v428, %v437
    %439 = vrot.lane.b32.xlu0 %v438, 96
    %v440 = vpop.permute.xlu0 %439
    %v441 = vsel %vm64, %v440, 0
    %443 = vmatprep.subr.mxu0 0.0
    %444 = vmatpush1.msra.mxu0 0.0
    %445 = vmatprep.subr.mxu0 0.0
    %446 = vmatpush1.msra.mxu0 0.0
    %447 = vmatprep.subr.mxu0 0.0
    %448 = vmatpush1.msra.mxu0 0.0
    %449 = vmatprep.subr.mxu0 0.0
    %450 = vmatpush1.msra.mxu0 0.0
    %451 = vmatprep.subr.mxu0 0.0
    %452 = vmatpush1.msra.mxu0 0.0
    %453 = vmatprep.subr.mxu0 0.0
    %454 = vmatpush1.msra.mxu0 0.0
    %455 = vmatprep.subr.mxu0 0.0
    %456 = vmatpush1.msra.mxu0 0.0
    %457 = vmatprep.subr.mxu0 0.0
    %458 = vmatpush1.msra.mxu0 0.0
    %459 = vmatprep.subr.mxu0 0.0
    %460 = vmatpush1.msra.mxu0 0.0
    %461 = vmatprep.subr.mxu0 0.0
    %462 = vmatpush1.msra.mxu0 0.0
    %463 = vmatprep.subr.mxu0 0.0
    %464 = vmatpush1.msra.mxu0 0.0
    %465 = vmatprep.subr.mxu0 0.0
    %466 = vmatpush1.msra.mxu0 0.0
    %467 = vmatprep.subr.mxu0 0.0
    %468 = vmatpush1.msra.mxu0 %v60
    %469 = vmatprep.subr.mxu0 0.0
    %470 = vmatpush1.msra.mxu0 %v59
    %471 = vmatprep.subr.mxu0 0.0
    %472 = vmatpush1.msra.mxu0 %v58
    %473 = vmatprep.subr.mxu0 0.0
    %474 = vmatpush1.msra.mxu0 %v57
    %475 = vmatprep.subr.mxu0 0.0
    %476 = vmatpush2.msra.mxu0 0.0
    %477 = vmatprep.subr.mxu0 0.0
    %478 = vmatpush2.msra.mxu0 0.0
    %479 = vmatprep.subr.mxu0 0.0
    %480 = vmatpush2.msra.mxu0 0.0
    %481 = vmatprep.subr.mxu0 0.0
    %482 = vmatpush2.msra.mxu0 0.0
    %483 = vmatprep.subr.mxu0 0.0
    %484 = vmatpush2.msra.mxu0 0.0
    %485 = vmatprep.subr.mxu0 0.0
    %486 = vmatpush2.msra.mxu0 0.0
    %487 = vmatprep.subr.mxu0 0.0
    %488 = vmatpush2.msra.mxu0 0.0
    %489 = vmatprep.subr.mxu0 0.0
    %490 = vmatpush2.msra.mxu0 0.0
    %491 = vmatprep.subr.mxu0 0.0
    %492 = vmatpush2.msra.mxu0 0.0
    %493 = vmatprep.subr.mxu0 0.0
    %494 = vmatpush2.msra.mxu0 0.0
    %495 = vmatprep.subr.mxu0 0.0
    %496 = vmatpush2.msra.mxu0 0.0
    %497 = vmatprep.subr.mxu0 0.0
    %498 = vmatpush2.msra.mxu0 0.0
    %499 = vmatprep.subr.mxu0 0.0
    %500 = vmatpush2.msra.mxu0 0.0
    %501 = vmatprep.subr.mxu0 0.0
    %502 = vmatpush2.msra.mxu0 0.0
    %503 = vmatprep.subr.mxu0 0.0
    %504 = vmatpush2.msra.mxu0 0.0
    %505 = vmatprep.subr.mxu0 0.0
    %506 = vmatpush2.msra.mxu0 0.0
    %507 = vmatprep.mubr.f32.mxu0 0.0
    %508 = vmatmul.mubr.f32.gmra.mxu0 %v441
    %v509 = vpop.f32.mrf.mxu0
    %v510 = vadd.f32 %v61, %v509
    %v511 = vpop.f32.mrf.mxu0
    %512 = vdwg.mxu0
    %v513 = vadd.f32 %v62, %v510
    %v514 = vxor.u32 %v513, 2147483648
    %v515 = vmul.f32 %v514, 1.442695
    %v516 = vpow.pop %v515
    %v517 = vadd.f32 %v516, 1.0
    %v518 = vrcp.pop %v517
    %v519 = vmul.f32 1.0, %v518
    %v522 = vunpack.c.l.s4 1966171168
    %v523 = vunpack.c.0.s8 %v522
    %v524 = vlaneseq
    %v525 = vshrl.u32 %v524, 7
    %v526 = vsub.s32 %v523, %v525
    %v527 = vrot.slane %v510, %v526
    %v529 = vunpack.c.l.s4 1966171168
    %v530 = vunpack.c.0.s8 %v529
    %v531 = vlaneseq
    %v532 = vshrl.u32 %v531, 7
    %v533 = vsub.s32 %v530, %v532
    %v534 = vrot.slane %v527, %v533
    %535 = vrot.lane.b32.xlu0 %v534, 64
    %v536 = vpop.permute.xlu0 %535
    %v538 = vmul.f32 %v519, %v536
    %540 = vrot.lane.b32.xlu0 %v538, 64
    %v541 = vpop.permute.xlu0 %540
    %v543 = vadd.f32 %v62, %v541
    %v544 = vtanh.pop %v543
    %v545 = vsub.f32 1.0, %v519
    %547 = vrot.lane.b32.xlu0 %v544, 96
    %v548 = vpop.permute.xlu0 %547
    %v550 = vmul.f32 %v545, %v548
    %v551 = vmul.f32 %v519, %v428
    %v552 = vadd.f32 %v550, %v551
    %p553 = scmp.eq.s32.totalorder %s56, 3
    %s554 = scalar_select %p553, 1, 0
    %v555 = vstv %s554
    %vm556 = vcmp.eq.s32.totalorder %v555, 1
    %v557 = vsel %vm556, %v552, %v433
    %v559 = vlaneseq
    %v560 = vshrl.u32 %v559, 7
    %v561 = vsub.s32 0, %v560
    %v562 = vrot.slane %v552, %v561
    %563 = vrot.lane.b32.xlu0 %v562, 96
    %v564 = vpop.permute.xlu0 %563
    %v565 = vsel %vm64, %v564, 0
    %567 = vmatprep.subr.mxu0 0.0
    %568 = vmatpush1.msra.mxu0 0.0
    %569 = vmatprep.subr.mxu0 0.0
    %570 = vmatpush1.msra.mxu0 0.0
    %571 = vmatprep.subr.mxu0 0.0
    %572 = vmatpush1.msra.mxu0 0.0
    %573 = vmatprep.subr.mxu0 0.0
    %574 = vmatpush1.msra.mxu0 0.0
    %575 = vmatprep.subr.mxu0 0.0
    %576 = vmatpush1.msra.mxu0 0.0
    %577 = vmatprep.subr.mxu0 0.0
    %578 = vmatpush1.msra.mxu0 0.0
    %579 = vmatprep.subr.mxu0 0.0
    %580 = vmatpush1.msra.mxu0 0.0
    %581 = vmatprep.subr.mxu0 0.0
    %582 = vmatpush1.msra.mxu0 0.0
    %583 = vmatprep.subr.mxu0 0.0
    %584 = vmatpush1.msra.mxu0 0.0
    %585 = vmatprep.subr.mxu0 0.0
    %586 = vmatpush1.msra.mxu0 0.0
    %587 = vmatprep.subr.mxu0 0.0
    %588 = vmatpush1.msra.mxu0 0.0
    %589 = vmatprep.subr.mxu0 0.0
    %590 = vmatpush1.msra.mxu0 0.0
    %591 = vmatprep.subr.mxu0 0.0
    %592 = vmatpush1.msra.mxu0 %v60
    %593 = vmatprep.subr.mxu0 0.0
    %594 = vmatpush1.msra.mxu0 %v59
    %595 = vmatprep.subr.mxu0 0.0
    %596 = vmatpush1.msra.mxu0 %v58
    %597 = vmatprep.subr.mxu0 0.0
    %598 = vmatpush1.msra.mxu0 %v57
    %599 = vmatprep.subr.mxu0 0.0
    %600 = vmatpush2.msra.mxu0 0.0
    %601 = vmatprep.subr.mxu0 0.0
    %602 = vmatpush2.msra.mxu0 0.0
    %603 = vmatprep.subr.mxu0 0.0
    %604 = vmatpush2.msra.mxu0 0.0
    %605 = vmatprep.subr.mxu0 0.0
    %606 = vmatpush2.msra.mxu0 0.0
    %607 = vmatprep.subr.mxu0 0.0
    %608 = vmatpush2.msra.mxu0 0.0
    %609 = vmatprep.subr.mxu0 0.0
    %610 = vmatpush2.msra.mxu0 0.0
    %611 = vmatprep.subr.mxu0 0.0
    %612 = vmatpush2.msra.mxu0 0.0
    %613 = vmatprep.subr.mxu0 0.0
    %614 = vmatpush2.msra.mxu0 0.0
    %615 = vmatprep.subr.mxu0 0.0
    %616 = vmatpush2.msra.mxu0 0.0
    %617 = vmatprep.subr.mxu0 0.0
    %618 = vmatpush2.msra.mxu0 0.0
    %619 = vmatprep.subr.mxu0 0.0
    %620 = vmatpush2.msra.mxu0 0.0
    %621 = vmatprep.subr.mxu0 0.0
    %622 = vmatpush2.msra.mxu0 0.0
    %623 = vmatprep.subr.mxu0 0.0
    %624 = vmatpush2.msra.mxu0 0.0
    %625 = vmatprep.subr.mxu0 0.0
    %626 = vmatpush2.msra.mxu0 0.0
    %627 = vmatprep.subr.mxu0 0.0
    %628 = vmatpush2.msra.mxu0 0.0
    %629 = vmatprep.subr.mxu0 0.0
    %630 = vmatpush2.msra.mxu0 0.0
    %631 = vmatprep.mubr.f32.mxu0 0.0
    %632 = vmatmul.mubr.f32.gmra.mxu0 %v565
    %v633 = vpop.f32.mrf.mxu0
    %v634 = vadd.f32 %v61, %v633
    %v635 = vpop.f32.mrf.mxu0
    %636 = vdwg.mxu0
    %v637 = vadd.f32 %v62, %v634
    %v638 = vxor.u32 %v637, 2147483648
    %v639 = vmul.f32 %v638, 1.442695
    %v640 = vpow.pop %v639
    %v641 = vadd.f32 %v640, 1.0
    %v642 = vrcp.pop %v641
    %v643 = vmul.f32 1.0, %v642
    %v646 = vunpack.c.l.s4 1966171168
    %v647 = vunpack.c.0.s8 %v646
    %v648 = vlaneseq
    %v649 = vshrl.u32 %v648, 7
    %v650 = vsub.s32 %v647, %v649
    %v651 = vrot.slane %v634, %v650
    %v653 = vunpack.c.l.s4 1966171168
    %v654 = vunpack.c.0.s8 %v653
    %v655 = vlaneseq
    %v656 = vshrl.u32 %v655, 7
    %v657 = vsub.s32 %v654, %v656
    %v658 = vrot.slane %v651, %v657
    %659 = vrot.lane.b32.xlu0 %v658, 64
    %v660 = vpop.permute.xlu0 %659
    %v662 = vmul.f32 %v643, %v660
    %664 = vrot.lane.b32.xlu0 %v662, 64
    %v665 = vpop.permute.xlu0 %664
    %v667 = vadd.f32 %v62, %v665
    %v668 = vtanh.pop %v667
    %v669 = vsub.f32 1.0, %v643
    %671 = vrot.lane.b32.xlu0 %v668, 96
    %v672 = vpop.permute.xlu0 %671
    %v674 = vmul.f32 %v669, %v672
    %v675 = vmul.f32 %v643, %v552
    %v676 = vadd.f32 %v674, %v675
    %p677 = scmp.eq.s32.totalorder %s56, 4
    %s678 = scalar_select %p677, 1, 0
    %v679 = vstv %s678
    %vm680 = vcmp.eq.s32.totalorder %v679, 1
    %v681 = vsel %vm680, %v676, %v557
    %v683 = vlaneseq
    %v684 = vshrl.u32 %v683, 7
    %v685 = vsub.s32 0, %v684
    %v686 = vrot.slane %v676, %v685
    %687 = vrot.lane.b32.xlu0 %v686, 96
    %v688 = vpop.permute.xlu0 %687
    %v689 = vsel %vm64, %v688, 0
    %691 = vmatprep.subr.mxu0 0.0
    %692 = vmatpush1.msra.mxu0 0.0
    %693 = vmatprep.subr.mxu0 0.0
    %694 = vmatpush1.msra.mxu0 0.0
    %695 = vmatprep.subr.mxu0 0.0
    %696 = vmatpush1.msra.mxu0 0.0
    %697 = vmatprep.subr.mxu0 0.0
    %698 = vmatpush1.msra.mxu0 0.0
    %699 = vmatprep.subr.mxu0 0.0
    %700 = vmatpush1.msra.mxu0 0.0
    %701 = vmatprep.subr.mxu0 0.0
    %702 = vmatpush1.msra.mxu0 0.0
    %703 = vmatprep.subr.mxu0 0.0
    %704 = vmatpush1.msra.mxu0 0.0
    %705 = vmatprep.subr.mxu0 0.0
    %706 = vmatpush1.msra.mxu0 0.0
    %707 = vmatprep.subr.mxu0 0.0
    %708 = vmatpush1.msra.mxu0 0.0
    %709 = vmatprep.subr.mxu0 0.0
    %710 = vmatpush1.msra.mxu0 0.0
    %711 = vmatprep.subr.mxu0 0.0
    %712 = vmatpush1.msra.mxu0 0.0
    %713 = vmatprep.subr.mxu0 0.0
    %714 = vmatpush1.msra.mxu0 0.0
    %715 = vmatprep.subr.mxu0 0.0
    %716 = vmatpush1.msra.mxu0 %v60
    %717 = vmatprep.subr.mxu0 0.0
    %718 = vmatpush1.msra.mxu0 %v59
    %719 = vmatprep.subr.mxu0 0.0
    %720 = vmatpush1.msra.mxu0 %v58
    %721 = vmatprep.subr.mxu0 0.0
    %722 = vmatpush1.msra.mxu0 %v57
    %723 = vmatprep.subr.mxu0 0.0
    %724 = vmatpush2.msra.mxu0 0.0
    %725 = vmatprep.subr.mxu0 0.0
    %726 = vmatpush2.msra.mxu0 0.0
    %727 = vmatprep.subr.mxu0 0.0
    %728 = vmatpush2.msra.mxu0 0.0
    %729 = vmatprep.subr.mxu0 0.0
    %730 = vmatpush2.msra.mxu0 0.0
    %731 = vmatprep.subr.mxu0 0.0
    %732 = vmatpush2.msra.mxu0 0.0
    %733 = vmatprep.subr.mxu0 0.0
    %734 = vmatpush2.msra.mxu0 0.0
    %735 = vmatprep.subr.mxu0 0.0
    %736 = vmatpush2.msra.mxu0 0.0
    %737 = vmatprep.subr.mxu0 0.0
    %738 = vmatpush2.msra.mxu0 0.0
    %739 = vmatprep.subr.mxu0 0.0
    %740 = vmatpush2.msra.mxu0 0.0
    %741 = vmatprep.subr.mxu0 0.0
    %742 = vmatpush2.msra.mxu0 0.0
    %743 = vmatprep.subr.mxu0 0.0
    %744 = vmatpush2.msra.mxu0 0.0
    %745 = vmatprep.subr.mxu0 0.0
    %746 = vmatpush2.msra.mxu0 0.0
    %747 = vmatprep.subr.mxu0 0.0
    %748 = vmatpush2.msra.mxu0 0.0
    %749 = vmatprep.subr.mxu0 0.0
    %750 = vmatpush2.msra.mxu0 0.0
    %751 = vmatprep.subr.mxu0 0.0
    %752 = vmatpush2.msra.mxu0 0.0
    %753 = vmatprep.subr.mxu0 0.0
    %754 = vmatpush2.msra.mxu0 0.0
    %755 = vmatprep.mubr.f32.mxu0 0.0
    %756 = vmatmul.mubr.f32.gmra.mxu0 %v689
    %v757 = vpop.f32.mrf.mxu0
    %v758 = vadd.f32 %v61, %v757
    %v759 = vpop.f32.mrf.mxu0
    %760 = vdwg.mxu0
    %v761 = vadd.f32 %v62, %v758
    %v762 = vxor.u32 %v761, 2147483648
    %v763 = vmul.f32 %v762, 1.442695
    %v764 = vpow.pop %v763
    %v765 = vadd.f32 %v764, 1.0
    %v766 = vrcp.pop %v765
    %v767 = vmul.f32 1.0, %v766
    %v770 = vunpack.c.l.s4 1966171168
    %v771 = vunpack.c.0.s8 %v770
    %v772 = vlaneseq
    %v773 = vshrl.u32 %v772, 7
    %v774 = vsub.s32 %v771, %v773
    %v775 = vrot.slane %v758, %v774
    %v777 = vunpack.c.l.s4 1966171168
    %v778 = vunpack.c.0.s8 %v777
    %v779 = vlaneseq
    %v780 = vshrl.u32 %v779, 7
    %v781 = vsub.s32 %v778, %v780
    %v782 = vrot.slane %v775, %v781
    %783 = vrot.lane.b32.xlu0 %v782, 64
    %v784 = vpop.permute.xlu0 %783
    %v786 = vmul.f32 %v767, %v784
    %788 = vrot.lane.b32.xlu0 %v786, 64
    %v789 = vpop.permute.xlu0 %788
    %v791 = vadd.f32 %v62, %v789
    %v792 = vtanh.pop %v791
    %v793 = vsub.f32 1.0, %v767
    %795 = vrot.lane.b32.xlu0 %v792, 96
    %v796 = vpop.permute.xlu0 %795
    %v798 = vmul.f32 %v793, %v796
    %v799 = vmul.f32 %v767, %v676
    %v800 = vadd.f32 %v798, %v799
    %p801 = scmp.eq.s32.totalorder %s56, 5
    %s802 = scalar_select %p801, 1, 0
    %v803 = vstv %s802
    %vm804 = vcmp.eq.s32.totalorder %v803, 1
    %v805 = vsel %vm804, %v800, %v681
    %v807 = vlaneseq
    %v808 = vshrl.u32 %v807, 7
    %v809 = vsub.s32 0, %v808
    %v810 = vrot.slane %v800, %v809
    %811 = vrot.lane.b32.xlu0 %v810, 96
    %v812 = vpop.permute.xlu0 %811
    %v813 = vsel %vm64, %v812, 0
    %815 = vmatprep.subr.mxu0 0.0
    %816 = vmatpush1.msra.mxu0 0.0
    %817 = vmatprep.subr.mxu0 0.0
    %818 = vmatpush1.msra.mxu0 0.0
    %819 = vmatprep.subr.mxu0 0.0
    %820 = vmatpush1.msra.mxu0 0.0
    %821 = vmatprep.subr.mxu0 0.0
    %822 = vmatpush1.msra.mxu0 0.0
    %823 = vmatprep.subr.mxu0 0.0
    %824 = vmatpush1.msra.mxu0 0.0
    %825 = vmatprep.subr.mxu0 0.0
    %826 = vmatpush1.msra.mxu0 0.0
    %827 = vmatprep.subr.mxu0 0.0
    %828 = vmatpush1.msra.mxu0 0.0
    %829 = vmatprep.subr.mxu0 0.0
    %830 = vmatpush1.msra.mxu0 0.0
    %831 = vmatprep.subr.mxu0 0.0
    %832 = vmatpush1.msra.mxu0 0.0
    %833 = vmatprep.subr.mxu0 0.0
    %834 = vmatpush1.msra.mxu0 0.0
    %835 = vmatprep.subr.mxu0 0.0
    %836 = vmatpush1.msra.mxu0 0.0
    %837 = vmatprep.subr.mxu0 0.0
    %838 = vmatpush1.msra.mxu0 0.0
    %839 = vmatprep.subr.mxu0 0.0
    %840 = vmatpush1.msra.mxu0 %v60
    %841 = vmatprep.subr.mxu0 0.0
    %842 = vmatpush1.msra.mxu0 %v59
    %843 = vmatprep.subr.mxu0 0.0
    %844 = vmatpush1.msra.mxu0 %v58
    %845 = vmatprep.subr.mxu0 0.0
    %846 = vmatpush1.msra.mxu0 %v57
    %847 = vmatprep.subr.mxu0 0.0
    %848 = vmatpush2.msra.mxu0 0.0
    %849 = vmatprep.subr.mxu0 0.0
    %850 = vmatpush2.msra.mxu0 0.0
    %851 = vmatprep.subr.mxu0 0.0
    %852 = vmatpush2.msra.mxu0 0.0
    %853 = vmatprep.subr.mxu0 0.0
    %854 = vmatpush2.msra.mxu0 0.0
    %855 = vmatprep.subr.mxu0 0.0
    %856 = vmatpush2.msra.mxu0 0.0
    %857 = vmatprep.subr.mxu0 0.0
    %858 = vmatpush2.msra.mxu0 0.0
    %859 = vmatprep.subr.mxu0 0.0
    %860 = vmatpush2.msra.mxu0 0.0
    %861 = vmatprep.subr.mxu0 0.0
    %862 = vmatpush2.msra.mxu0 0.0
    %863 = vmatprep.subr.mxu0 0.0
    %864 = vmatpush2.msra.mxu0 0.0
    %865 = vmatprep.subr.mxu0 0.0
    %866 = vmatpush2.msra.mxu0 0.0
    %867 = vmatprep.subr.mxu0 0.0
    %868 = vmatpush2.msra.mxu0 0.0
    %869 = vmatprep.subr.mxu0 0.0
    %870 = vmatpush2.msra.mxu0 0.0
    %871 = vmatprep.subr.mxu0 0.0
    %872 = vmatpush2.msra.mxu0 0.0
    %873 = vmatprep.subr.mxu0 0.0
    %874 = vmatpush2.msra.mxu0 0.0
    %875 = vmatprep.subr.mxu0 0.0
    %876 = vmatpush2.msra.mxu0 0.0
    %877 = vmatprep.subr.mxu0 0.0
    %878 = vmatpush2.msra.mxu0 0.0
    %879 = vmatprep.mubr.f32.mxu0 0.0
    %880 = vmatmul.mubr.f32.gmra.mxu0 %v813
    %v881 = vpop.f32.mrf.mxu0
    %v882 = vadd.f32 %v61, %v881
    %v883 = vpop.f32.mrf.mxu0
    %884 = vdwg.mxu0
    %v885 = vadd.f32 %v62, %v882
    %v886 = vxor.u32 %v885, 2147483648
    %v887 = vmul.f32 %v886, 1.442695
    %v888 = vpow.pop %v887
    %v889 = vadd.f32 %v888, 1.0
    %v890 = vrcp.pop %v889
    %v891 = vmul.f32 1.0, %v890
    %v894 = vunpack.c.l.s4 1966171168
    %v895 = vunpack.c.0.s8 %v894
    %v896 = vlaneseq
    %v897 = vshrl.u32 %v896, 7
    %v898 = vsub.s32 %v895, %v897
    %v899 = vrot.slane %v882, %v898
    %v901 = vunpack.c.l.s4 1966171168
    %v902 = vunpack.c.0.s8 %v901
    %v903 = vlaneseq
    %v904 = vshrl.u32 %v903, 7
    %v905 = vsub.s32 %v902, %v904
    %v906 = vrot.slane %v899, %v905
    %907 = vrot.lane.b32.xlu0 %v906, 64
    %v908 = vpop.permute.xlu0 %907
    %v910 = vmul.f32 %v891, %v908
    %912 = vrot.lane.b32.xlu0 %v910, 64
    %v913 = vpop.permute.xlu0 %912
    %v915 = vadd.f32 %v62, %v913
    %v916 = vtanh.pop %v915
    %v917 = vsub.f32 1.0, %v891
    %919 = vrot.lane.b32.xlu0 %v916, 96
    %v920 = vpop.permute.xlu0 %919
    %v922 = vmul.f32 %v917, %v920
    %v923 = vmul.f32 %v891, %v800
    %v924 = vadd.f32 %v922, %v923
    %p925 = scmp.eq.s32.totalorder %s56, 6
    %s926 = scalar_select %p925, 1, 0
    %v927 = vstv %s926
    %vm928 = vcmp.eq.s32.totalorder %v927, 1
    %v929 = vsel %vm928, %v924, %v805
    %v931 = vlaneseq
    %v932 = vshrl.u32 %v931, 7
    %v933 = vsub.s32 0, %v932
    %v934 = vrot.slane %v924, %v933
    %935 = vrot.lane.b32.xlu0 %v934, 96
    %v936 = vpop.permute.xlu0 %935
    %v937 = vsel %vm64, %v936, 0
    %939 = vmatprep.subr.mxu0 0.0
    %940 = vmatpush1.msra.mxu0 0.0
    %941 = vmatprep.subr.mxu0 0.0
    %942 = vmatpush1.msra.mxu0 0.0
    %943 = vmatprep.subr.mxu0 0.0
    %944 = vmatpush1.msra.mxu0 0.0
    %945 = vmatprep.subr.mxu0 0.0
    %946 = vmatpush1.msra.mxu0 0.0
    %947 = vmatprep.subr.mxu0 0.0
    %948 = vmatpush1.msra.mxu0 0.0
    %949 = vmatprep.subr.mxu0 0.0
    %950 = vmatpush1.msra.mxu0 0.0
    %951 = vmatprep.subr.mxu0 0.0
    %952 = vmatpush1.msra.mxu0 0.0
    %953 = vmatprep.subr.mxu0 0.0
    %954 = vmatpush1.msra.mxu0 0.0
    %955 = vmatprep.subr.mxu0 0.0
    %956 = vmatpush1.msra.mxu0 0.0
    %957 = vmatprep.subr.mxu0 0.0
    %958 = vmatpush1.msra.mxu0 0.0
    %959 = vmatprep.subr.mxu0 0.0
    %960 = vmatpush1.msra.mxu0 0.0
    %961 = vmatprep.subr.mxu0 0.0
    %962 = vmatpush1.msra.mxu0 0.0
    %963 = vmatprep.subr.mxu0 0.0
    %964 = vmatpush1.msra.mxu0 %v60
    %965 = vmatprep.subr.mxu0 0.0
    %966 = vmatpush1.msra.mxu0 %v59
    %967 = vmatprep.subr.mxu0 0.0
    %968 = vmatpush1.msra.mxu0 %v58
    %969 = vmatprep.subr.mxu0 0.0
    %970 = vmatpush1.msra.mxu0 %v57
    %971 = vmatprep.subr.mxu0 0.0
    %972 = vmatpush2.msra.mxu0 0.0
    %973 = vmatprep.subr.mxu0 0.0
    %974 = vmatpush2.msra.mxu0 0.0
    %975 = vmatprep.subr.mxu0 0.0
    %976 = vmatpush2.msra.mxu0 0.0
    %977 = vmatprep.subr.mxu0 0.0
    %978 = vmatpush2.msra.mxu0 0.0
    %979 = vmatprep.subr.mxu0 0.0
    %980 = vmatpush2.msra.mxu0 0.0
    %981 = vmatprep.subr.mxu0 0.0
    %982 = vmatpush2.msra.mxu0 0.0
    %983 = vmatprep.subr.mxu0 0.0
    %984 = vmatpush2.msra.mxu0 0.0
    %985 = vmatprep.subr.mxu0 0.0
    %986 = vmatpush2.msra.mxu0 0.0
    %987 = vmatprep.subr.mxu0 0.0
    %988 = vmatpush2.msra.mxu0 0.0
    %989 = vmatprep.subr.mxu0 0.0
    %990 = vmatpush2.msra.mxu0 0.0
    %991 = vmatprep.subr.mxu0 0.0
    %992 = vmatpush2.msra.mxu0 0.0
    %993 = vmatprep.subr.mxu0 0.0
    %994 = vmatpush2.msra.mxu0 0.0
    %995 = vmatprep.subr.mxu0 0.0
    %996 = vmatpush2.msra.mxu0 0.0
    %997 = vmatprep.subr.mxu0 0.0
    %998 = vmatpush2.msra.mxu0 0.0
    %999 = vmatprep.subr.mxu0 0.0
    %1000 = vmatpush2.msra.mxu0 0.0
    %1001 = vmatprep.subr.mxu0 0.0
    %1002 = vmatpush2.msra.mxu0 0.0
    %1003 = vmatprep.mubr.f32.mxu0 0.0
    %1004 = vmatmul.mubr.f32.gmra.mxu0 %v937
    %v1005 = vpop.f32.mrf.mxu0
    %v1006 = vadd.f32 %v61, %v1005
    %v1007 = vpop.f32.mrf.mxu0
    %1008 = vdwg.mxu0
    %v1009 = vadd.f32 %v62, %v1006
    %v1010 = vxor.u32 %v1009, 2147483648
    %v1011 = vmul.f32 %v1010, 1.442695
    %v1012 = vpow.pop %v1011
    %v1013 = vadd.f32 %v1012, 1.0
    %v1014 = vrcp.pop %v1013
    %v1015 = vmul.f32 1.0, %v1014
    %v1018 = vunpack.c.l.s4 1966171168
    %v1019 = vunpack.c.0.s8 %v1018
    %v1020 = vlaneseq
    %v1021 = vshrl.u32 %v1020, 7
    %v1022 = vsub.s32 %v1019, %v1021
    %v1023 = vrot.slane %v1006, %v1022
    %v1025 = vunpack.c.l.s4 1966171168
    %v1026 = vunpack.c.0.s8 %v1025
    %v1027 = vlaneseq
    %v1028 = vshrl.u32 %v1027, 7
    %v1029 = vsub.s32 %v1026, %v1028
    %v1030 = vrot.slane %v1023, %v1029
    %1031 = vrot.lane.b32.xlu0 %v1030, 64
    %v1032 = vpop.permute.xlu0 %1031
    %v1034 = vmul.f32 %v1015, %v1032
    %1036 = vrot.lane.b32.xlu0 %v1034, 64
    %v1037 = vpop.permute.xlu0 %1036
    %v1039 = vadd.f32 %v62, %v1037
    %v1040 = vtanh.pop %v1039
    %v1041 = vsub.f32 1.0, %v1015
    %1043 = vrot.lane.b32.xlu0 %v1040, 96
    %v1044 = vpop.permute.xlu0 %1043
    %v1046 = vmul.f32 %v1041, %v1044
    %v1047 = vmul.f32 %v1015, %v924
    %v1048 = vadd.f32 %v1046, %v1047
    %p1049 = scmp.eq.s32.totalorder %s56, 7
    %s1050 = scalar_select %p1049, 1, 0
    %v1051 = vstv %s1050
    %vm1052 = vcmp.eq.s32.totalorder %v1051, 1
    %v1053 = vsel %vm1052, %v1048, %v929
    %v1054 = vld [vmem:[#allocation6] sm:$0xff]
    %v1055 = vld [vmem:[#allocation6 + $0x8] sm:$0xff]
    %v1056 = vld [vmem:[#allocation6 + $0x10] sm:$0xff]
    %v1057 = vld [vmem:[#allocation6 + $0x18] sm:$0xff]
    %v1058 = vld [vmem:[%s6] sm:$0x1]
    %v1060 = vlaneseq
    %v1061 = vshrl.u32 %v1060, 7
    %v1062 = vsub.s32 0, %v1061
    %v1063 = vrot.slane %v1053, %v1062
    %1064 = vrot.lane.b32.xlu0 %v1063, 96
    %v1065 = vpop.permute.xlu0 %1064
    %v1066 = vsel %vm64, %v1065, 0
    %1068 = vmatprep.subr.mxu0 0.0
    %1069 = vmatpush1.msra.mxu0 0.0
    %1070 = vmatprep.subr.mxu0 0.0
    %1071 = vmatpush1.msra.mxu0 0.0
    %1072 = vmatprep.subr.mxu0 0.0
    %1073 = vmatpush1.msra.mxu0 0.0
    %1074 = vmatprep.subr.mxu0 0.0
    %1075 = vmatpush1.msra.mxu0 0.0
    %1076 = vmatprep.subr.mxu0 0.0
    %1077 = vmatpush1.msra.mxu0 0.0
    %1078 = vmatprep.subr.mxu0 0.0
    %1079 = vmatpush1.msra.mxu0 0.0
    %1080 = vmatprep.subr.mxu0 0.0
    %1081 = vmatpush1.msra.mxu0 0.0
    %1082 = vmatprep.subr.mxu0 0.0
    %1083 = vmatpush1.msra.mxu0 0.0
    %1084 = vmatprep.subr.mxu0 0.0
    %1085 = vmatpush1.msra.mxu0 0.0
    %1086 = vmatprep.subr.mxu0 0.0
    %1087 = vmatpush1.msra.mxu0 0.0
    %1088 = vmatprep.subr.mxu0 0.0
    %1089 = vmatpush1.msra.mxu0 0.0
    %1090 = vmatprep.subr.mxu0 0.0
    %1091 = vmatpush1.msra.mxu0 0.0
    %1092 = vmatprep.subr.mxu0 0.0
    %1093 = vmatpush1.msra.mxu0 %v1057
    %1094 = vmatprep.subr.mxu0 0.0
    %1095 = vmatpush1.msra.mxu0 %v1056
    %1096 = vmatprep.subr.mxu0 0.0
    %1097 = vmatpush1.msra.mxu0 %v1055
    %1098 = vmatprep.subr.mxu0 0.0
    %1099 = vmatpush1.msra.mxu0 %v1054
    %1100 = vmatprep.subr.mxu0 0.0
    %1101 = vmatpush2.msra.mxu0 0.0
    %1102 = vmatprep.subr.mxu0 0.0
    %1103 = vmatpush2.msra.mxu0 0.0
    %1104 = vmatprep.subr.mxu0 0.0
    %1105 = vmatpush2.msra.mxu0 0.0
    %1106 = vmatprep.subr.mxu0 0.0
    %1107 = vmatpush2.msra.mxu0 0.0
    %1108 = vmatprep.subr.mxu0 0.0
    %1109 = vmatpush2.msra.mxu0 0.0
    %1110 = vmatprep.subr.mxu0 0.0
    %1111 = vmatpush2.msra.mxu0 0.0
    %1112 = vmatprep.subr.mxu0 0.0
    %1113 = vmatpush2.msra.mxu0 0.0
    %1114 = vmatprep.subr.mxu0 0.0
    %1115 = vmatpush2.msra.mxu0 0.0
    %1116 = vmatprep.subr.mxu0 0.0
    %1117 = vmatpush2.msra.mxu0 0.0
    %1118 = vmatprep.subr.mxu0 0.0
    %1119 = vmatpush2.msra.mxu0 0.0
    %1120 = vmatprep.subr.mxu0 0.0
    %1121 = vmatpush2.msra.mxu0 0.0
    %1122 = vmatprep.subr.mxu0 0.0
    %1123 = vmatpush2.msra.mxu0 0.0
    %1124 = vmatprep.subr.mxu0 0.0
    %1125 = vmatpush2.msra.mxu0 0.0
    %1126 = vmatprep.subr.mxu0 0.0
    %1127 = vmatpush2.msra.mxu0 0.0
    %1128 = vmatprep.subr.mxu0 0.0
    %1129 = vmatpush2.msra.mxu0 0.0
    %1130 = vmatprep.subr.mxu0 0.0
    %1131 = vmatpush2.msra.mxu0 0.0
    %1132 = vmatprep.mubr.f32.mxu0 0.0
    %1133 = vmatmul.mubr.f32.gmra.mxu0 %v1066
    %v1134 = vpop.f32.mrf.mxu0
    %v1135 = vadd.f32 %v1058, %v1134
    %v1136 = vpop.f32.mrf.mxu0
    %1137 = vdwg.mxu0
    %vm1138 = vcmask 516096
    %1139 = vst.msk [vmem:[#allocation8] sm:$0x1] %vm1138, %v1135
    // Predicated region
    $region38: #{tpu_custom_call.1} parent=1 // pred_check
      _
    $region39: #{tpu_custom_call.1} parent=1 // pred_check_branch
      %1141 = sbr.rel (0) target = $region41
    $region40: #{tpu_custom_call.1} parent=1 // pred_region
      %s1143 = ssub.s32 16, 16
      %1144 = vsyncadd [#allocation5], %s1143
      %s1146 = sshll.u32 [#allocation8], 4
      %s1147 = int_to_ptr.vmem [resolvable:$true] %s1146
      %1149 = dma.vmem_to_hbm [thread:$0]  %s1147, 16, %s7, [#allocation5]
    $region41: #{tpu_custom_call.1} parent=1 // pred_fallthru
      _
    // Predicated region
    $region42: #{tpu_custom_call.1} parent=1 // pred_check
      _
    $region43: #{tpu_custom_call.1} parent=1 // pred_check_branch
      %1151 = sbr.rel (0) target = $region45
    $region44: #{tpu_custom_call.1} parent=1 // pred_region
      %1152 = dma.done [#allocation5], 16
    $region45: #{tpu_custom_call.1} parent=1 // pred_fallthru
      _
    %1153 = vsyncpa [#allocation4], 1
    %1154 = vsyncpa [#allocation7], 1
    %1155 = vsyncpa [#allocation5], 1

</llo_original>
